<compile_context>
chip_gen: v7x
topology: tpu7x:2x2x1
jax: 0.10.0
libtpu: 0.0.40
codegen_flags: <defaults>
</compile_context>

<pallas_src>
import functools

import jax
import jax.numpy as jnp
from jax import lax
from jax.experimental import pallas as pl
from jax.experimental.pallas import tpu as pltpu

EPS = 1e-5                      # PyTorch BatchNorm1d default eps
MATMUL_DTYPE = jnp.bfloat16     # MXU-native operands (f32 accumulate); set jnp.float32 for bit-parity.


def _full_spec(shape):
    # whole-array block (grid is empty -> single program)
    return pl.BlockSpec(shape, lambda: (0,) * len(shape))


def _bn_train(h, gamma=None, beta=None, relu=False):
    # Train-mode BatchNorm1d: biased variance, eps=1e-5.  (h - mean) is reused
    # for both the variance and the normalized output (single diff pass).
    mean = jnp.mean(h, axis=0, keepdims=True)
    d = h - mean
    var = jnp.mean(d * d, axis=0, keepdims=True)
    out = d * lax.rsqrt(var + EPS)
    if gamma is not None:
        out = out * gamma + beta
    if relu:
        out = jnp.maximum(out, 0.0)
    return out


def fused_barlow_kernel(*refs, n_hidden, batch_size, lambd):
    """Projector (both branches stacked) + BN + cross-correlation + loss, one program."""
    feat_ref = refs[0]
    o_ref = refs[-1]
    p = refs[1:-1]                    # [w0, g0, b0, w1, g1, b1, ..., w_last]
    n = feat_ref.shape[0] // 2        # per-branch batch (rows [0:n] = y1, [n:2n] = y2)

    h = feat_ref[...]                 # (2n, d_in) f32
    for i in range(n_hidden):
        w = p[3 * i][...]
        g = p[3 * i + 1][...]
        b = p[3 * i + 2][...]
        hm = jnp.dot(h.astype(MATMUL_DTYPE), w.astype(MATMUL_DTYPE),
                     preferred_element_type=jnp.float32)
        # BatchNorm statistics are per branch (batch of n), NOT over the stacked 2n rows.
        h = jnp.concatenate(
            [_bn_train(hm[:n], g, b, relu=True),
             _bn_train(hm[n:], g, b, relu=True)], axis=0)

    z = jnp.dot(h.astype(MATMUL_DTYPE), p[-1][...].astype(MATMUL_DTYPE),
                preferred_element_type=jnp.float32)
    z1n = _bn_train(z[:n])            # self.bn: BatchNorm1d(affine=False)
    z2n = _bn_train(z[n:])

    # c = bn(z1).T @ bn(z2) / batch_size, contracting the batch axis directly
    # (no materialized transpose on the (n, D) tile).
    c = lax.dot_general(z1n, z2n, dimension_numbers=(((0,), (0,)), ((), ())),
                        preferred_element_type=jnp.float32) * (1.0 / batch_size)
    # TODO(synk): torch.distributed.all_reduce(c) — single-device run, identity.

    dproj = c.shape[0]
    row = lax.broadcasted_iota(jnp.int32, (dproj, dproj), 0)
    col = lax.broadcasted_iota(jnp.int32, (dproj, dproj), 1)
    is_diag = row == col
    cc = c * c
    total = jnp.sum(cc, keepdims=True)                           # sum_ij c_ij^2
    diag_sq = jnp.sum(jnp.where(is_diag, cc, 0.0), keepdims=True)  # sum_i c_ii^2
    diag_sum = jnp.sum(jnp.where(is_diag, c, 0.0), keepdims=True)  # sum_i c_ii
    on_diag = diag_sq - 2.0 * diag_sum + float(dproj)            # sum_i (c_ii - 1)^2
    off_diag = total - diag_sq                                   # sum_{i!=j} c_ij^2
    loss = on_diag + lambd * off_diag                            # (1, 1)

    # Lane-padded (1, 128) output -> unmasked store; caller reads element [0, 0].
    o_ref[...] = loss * jnp.ones((1, o_ref.shape[1]), jnp.float32)


def _cost_estimate(feat, params, w_last, out_lanes):
    m, _ = feat.shape
    flops = 0
    for (w, _, _) in params:
        flops += 2 * m * w.shape[0] * w.shape[1]
    flops += 2 * m * w_last.shape[0] * w_last.shape[1]
    dproj = w_last.shape[1]
    flops += 2 * dproj * (m // 2) * dproj                        # cross-correlation
    transcendentals = 2 * (len(params) + 1) * dproj              # rsqrt per BN feature per branch
    nbytes = feat.size * feat.dtype.itemsize
    for (w, g, b) in params:
        nbytes += (w.size * w.dtype.itemsize + g.size * g.dtype.itemsize
                   + b.size * b.dtype.itemsize)
    nbytes += w_last.size * w_last.dtype.itemsize + out_lanes * 4
    return pl.CostEstimate(flops=flops, transcendentals=transcendentals,
                           bytes_accessed=nbytes)


# ---- Model glue (plain JAX) ----
class Args:
    projector = "128-128-128"
    lambd = 0.0051
    batch_size = 8
    num_classes = 2


def backbone(y):
    # TODO(synk): DenseNet121-3D encoder not translated; flatten stand-in
    # producing (N, 1024) features so sizes[0] == 1024 matches the module.
    n = y.shape[0]
    return y.reshape(n, -1).astype(jnp.float32)


def init_params(key, sizes):
    # TODO(synk): PyTorch nn.Linear default is Kaiming-uniform; scaled normal used here.
    params = []
    for i in range(len(sizes) - 2):
        key, k = jax.random.split(key)
        w = jax.random.normal(k, (sizes[i], sizes[i + 1]), jnp.float32)
        w = (w * (1.0 / jnp.sqrt(jnp.float32(sizes[i])))).astype(MATMUL_DTYPE)
        gamma = jnp.ones((1, sizes[i + 1]), jnp.float32)   # BN affine init
        beta = jnp.zeros((1, sizes[i + 1]), jnp.float32)
        params.append((w, gamma, beta))
    key, k = jax.random.split(key)
    w_last = jax.random.normal(k, (sizes[-2], sizes[-1]), jnp.float32)
    w_last = (w_last * (1.0 / jnp.sqrt(jnp.float32(sizes[-2])))).astype(MATMUL_DTYPE)
    return params, w_last


def barlow_twins_forward(y1, y2, params, w_last, args):
    # Stack the two branches along the batch axis so each weight is used on a
    # single M = 2N matmul per layer inside the fused kernel.
    feat = jnp.concatenate([backbone(y1), backbone(y2)], axis=0)   # (2N, 1024)

    flat = []
    for (w, g, b) in params:
        flat += [w, g, b]
    flat.append(w_last)

    out_lanes = 128
    kern = functools.partial(fused_barlow_kernel, n_hidden=len(params),
                             batch_size=float(args.batch_size), lambd=float(args.lambd))
    out = pl.pallas_call(
        kern,
        out_shape=jax.ShapeDtypeStruct((1, out_lanes), jnp.float32),
        in_specs=[_full_spec(feat.shape)] + [_full_spec(p.shape) for p in flat],
        out_specs=_full_spec((1, out_lanes)),
        compiler_params=pltpu.CompilerParams(vmem_limit_bytes=8 * 1024 * 1024),
        cost_estimate=_cost_estimate(feat, params, w_last, out_lanes),
    )(feat, *flat)
    return out[0, 0]


if __name__ == "__main__":
    args = Args()
    sizes = [1024] + list(map(int, args.projector.split("-")))

    key = jax.random.PRNGKey(0)
    k1, k2, kp = jax.random.split(key, 3)
    # NCDHW: (N=8, C=2, D=8, H=8, W=8) -> flatten gives 1024 features.
    y1 = jax.random.normal(k1, (args.batch_size, 2, 8, 8, 8), jnp.float32)
    y2 = jax.random.normal(k2, (args.batch_size, 2, 8, 8, 8), jnp.float32)
    params, w_last = init_params(kp, sizes)

    loss = barlow_twins_forward(y1, y2, params, w_last, args)
    jax.block_until_ready(loss)
    print("KERNEL_OK")
</pallas_src>

<mosaic_0001>
module attributes {stable_mosaic.version = 11 : i64} {
  func.func @fused_barlow_kernel(%arg0: memref<16x1024xf32, #tpu.memory_space<vmem>>, %arg1: memref<1024x128xbf16, #tpu.memory_space<vmem>>, %arg2: memref<1x128xf32, #tpu.memory_space<vmem>>, %arg3: memref<1x128xf32, #tpu.memory_space<vmem>>, %arg4: memref<128x128xbf16, #tpu.memory_space<vmem>>, %arg5: memref<1x128xf32, #tpu.memory_space<vmem>>, %arg6: memref<1x128xf32, #tpu.memory_space<vmem>>, %arg7: memref<128x128xbf16, #tpu.memory_space<vmem>>, %arg8: memref<1x128xf32, #tpu.memory_space<vmem>>) attributes {dimension_semantics = [], scalar_prefetch = 0 : i64, scratch_operands = 0 : i64, tpu.core_type = #tpu.core_type<tc>} {
    %c0 = arith.constant 0 : index
    %c0_0 = arith.constant 0 : index
    %0 = vector.load %arg0[%c0, %c0_0] : memref<16x1024xf32, #tpu.memory_space<vmem>>, vector<16x1024xf32>
    %c0_1 = arith.constant 0 : index
    %c0_2 = arith.constant 0 : index
    %1 = vector.load %arg1[%c0_1, %c0_2] : memref<1024x128xbf16, #tpu.memory_space<vmem>>, vector<1024x128xbf16>
    %c0_3 = arith.constant 0 : index
    %c0_4 = arith.constant 0 : index
    %2 = vector.load %arg2[%c0_3, %c0_4] : memref<1x128xf32, #tpu.memory_space<vmem>>, vector<1x128xf32>
    %c0_5 = arith.constant 0 : index
    %c0_6 = arith.constant 0 : index
    %3 = vector.load %arg3[%c0_5, %c0_6] : memref<1x128xf32, #tpu.memory_space<vmem>>, vector<1x128xf32>
    %4 = arith.truncf %0 : vector<16x1024xf32> to vector<16x1024xbf16>
    %cst = arith.constant dense<0.000000e+00> : vector<16x128xf32>
    %5 = tpu.matmul %4, %1, %cst {dimension_numbers = #tpu.dot_dimension_numbers<[1], [0], [0], [1], [0, 0, 1, 1], [], []>} : vector<16x1024xbf16>, vector<1024x128xbf16>, vector<16x128xf32> -> vector<16x128xf32>
    %6 = vector.extract_strided_slice %5 {offsets = [0, 0], sizes = [8, 128], strides = [1, 1]} : vector<16x128xf32> to vector<8x128xf32>
    %cst_7 = arith.constant dense<0.000000e+00> : vector<128xf32>
    %7 = vector.multi_reduction <add>, %6, %cst_7 [0] : vector<8x128xf32> to vector<128xf32>
    %8 = vector.shape_cast %7 : vector<128xf32> to vector<1x128xf32>
    %cst_8 = arith.constant 8.000000e+00 : f32
    %9 = vector.broadcast %cst_8 : f32 to vector<1x128xf32>
    %10 = arith.divf %8, %9 : vector<1x128xf32>
    %11 = vector.broadcast %10 : vector<1x128xf32> to vector<8x128xf32>
    %12 = arith.subf %6, %11 : vector<8x128xf32>
    %13 = arith.mulf %12, %12 : vector<8x128xf32>
    %cst_9 = arith.constant dense<0.000000e+00> : vector<128xf32>
    %14 = vector.multi_reduction <add>, %13, %cst_9 [0] : vector<8x128xf32> to vector<128xf32>
    %15 = vector.shape_cast %14 : vector<128xf32> to vector<1x128xf32>
    %cst_10 = arith.constant 8.000000e+00 : f32
    %16 = vector.broadcast %cst_10 : f32 to vector<1x128xf32>
    %17 = arith.divf %15, %16 : vector<1x128xf32>
    %cst_11 = arith.constant 9.99999974E-6 : f32
    %18 = vector.broadcast %cst_11 : f32 to vector<1x128xf32>
    %19 = arith.addf %17, %18 : vector<1x128xf32>
    %20 = math.rsqrt %19 : vector<1x128xf32>
    %21 = vector.broadcast %20 : vector<1x128xf32> to vector<8x128xf32>
    %22 = arith.mulf %12, %21 : vector<8x128xf32>
    %23 = vector.broadcast %2 : vector<1x128xf32> to vector<8x128xf32>
    %24 = arith.mulf %22, %23 : vector<8x128xf32>
    %25 = vector.broadcast %3 : vector<1x128xf32> to vector<8x128xf32>
    %26 = arith.addf %24, %25 : vector<8x128xf32>
    %cst_12 = arith.constant 0.000000e+00 : f32
    %27 = vector.broadcast %cst_12 : f32 to vector<8x128xf32>
    %28 = arith.maximumf %26, %27 : vector<8x128xf32>
    %29 = vector.extract_strided_slice %5 {offsets = [8, 0], sizes = [8, 128], strides = [1, 1]} : vector<16x128xf32> to vector<8x128xf32>
    %cst_13 = arith.constant dense<0.000000e+00> : vector<128xf32>
    %30 = vector.multi_reduction <add>, %29, %cst_13 [0] : vector<8x128xf32> to vector<128xf32>
    %31 = vector.shape_cast %30 : vector<128xf32> to vector<1x128xf32>
    %cst_14 = arith.constant 8.000000e+00 : f32
    %32 = vector.broadcast %cst_14 : f32 to vector<1x128xf32>
    %33 = arith.divf %31, %32 : vector<1x128xf32>
    %34 = vector.broadcast %33 : vector<1x128xf32> to vector<8x128xf32>
    %35 = arith.subf %29, %34 : vector<8x128xf32>
    %36 = arith.mulf %35, %35 : vector<8x128xf32>
    %cst_15 = arith.constant dense<0.000000e+00> : vector<128xf32>
    %37 = vector.multi_reduction <add>, %36, %cst_15 [0] : vector<8x128xf32> to vector<128xf32>
    %38 = vector.shape_cast %37 : vector<128xf32> to vector<1x128xf32>
    %cst_16 = arith.constant 8.000000e+00 : f32
    %39 = vector.broadcast %cst_16 : f32 to vector<1x128xf32>
    %40 = arith.divf %38, %39 : vector<1x128xf32>
    %cst_17 = arith.constant 9.99999974E-6 : f32
    %41 = vector.broadcast %cst_17 : f32 to vector<1x128xf32>
    %42 = arith.addf %40, %41 : vector<1x128xf32>
    %43 = math.rsqrt %42 : vector<1x128xf32>
    %44 = vector.broadcast %43 : vector<1x128xf32> to vector<8x128xf32>
    %45 = arith.mulf %35, %44 : vector<8x128xf32>
    %46 = vector.broadcast %2 : vector<1x128xf32> to vector<8x128xf32>
    %47 = arith.mulf %45, %46 : vector<8x128xf32>
    %48 = vector.broadcast %3 : vector<1x128xf32> to vector<8x128xf32>
    %49 = arith.addf %47, %48 : vector<8x128xf32>
    %cst_18 = arith.constant 0.000000e+00 : f32
    %50 = vector.broadcast %cst_18 : f32 to vector<8x128xf32>
    %51 = arith.maximumf %49, %50 : vector<8x128xf32>
    %52 = tpu.concatenate %28, %51 in 0 : vector<8x128xf32>, vector<8x128xf32> -> vector<16x128xf32>
    %c0_19 = arith.constant 0 : index
    %c0_20 = arith.constant 0 : index
    %53 = vector.load %arg4[%c0_19, %c0_20] : memref<128x128xbf16, #tpu.memory_space<vmem>>, vector<128x128xbf16>
    %c0_21 = arith.constant 0 : index
    %c0_22 = arith.constant 0 : index
    %54 = vector.load %arg5[%c0_21, %c0_22] : memref<1x128xf32, #tpu.memory_space<vmem>>, vector<1x128xf32>
    %c0_23 = arith.constant 0 : index
    %c0_24 = arith.constant 0 : index
    %55 = vector.load %arg6[%c0_23, %c0_24] : memref<1x128xf32, #tpu.memory_space<vmem>>, vector<1x128xf32>
    %56 = arith.truncf %52 : vector<16x128xf32> to vector<16x128xbf16>
    %cst_25 = arith.constant dense<0.000000e+00> : vector<16x128xf32>
    %57 = tpu.matmul %56, %53, %cst_25 {dimension_numbers = #tpu.dot_dimension_numbers<[1], [0], [0], [1], [0, 0, 1, 1], [], []>} : vector<16x128xbf16>, vector<128x128xbf16>, vector<16x128xf32> -> vector<16x128xf32>
    %58 = vector.extract_strided_slice %57 {offsets = [0, 0], sizes = [8, 128], strides = [1, 1]} : vector<16x128xf32> to vector<8x128xf32>
    %cst_26 = arith.constant dense<0.000000e+00> : vector<128xf32>
    %59 = vector.multi_reduction <add>, %58, %cst_26 [0] : vector<8x128xf32> to vector<128xf32>
    %60 = vector.shape_cast %59 : vector<128xf32> to vector<1x128xf32>
    %cst_27 = arith.constant 8.000000e+00 : f32
    %61 = vector.broadcast %cst_27 : f32 to vector<1x128xf32>
    %62 = arith.divf %60, %61 : vector<1x128xf32>
    %63 = vector.broadcast %62 : vector<1x128xf32> to vector<8x128xf32>
    %64 = arith.subf %58, %63 : vector<8x128xf32>
    %65 = arith.mulf %64, %64 : vector<8x128xf32>
    %cst_28 = arith.constant dense<0.000000e+00> : vector<128xf32>
    %66 = vector.multi_reduction <add>, %65, %cst_28 [0] : vector<8x128xf32> to vector<128xf32>
    %67 = vector.shape_cast %66 : vector<128xf32> to vector<1x128xf32>
    %cst_29 = arith.constant 8.000000e+00 : f32
    %68 = vector.broadcast %cst_29 : f32 to vector<1x128xf32>
    %69 = arith.divf %67, %68 : vector<1x128xf32>
    %cst_30 = arith.constant 9.99999974E-6 : f32
    %70 = vector.broadcast %cst_30 : f32 to vector<1x128xf32>
    %71 = arith.addf %69, %70 : vector<1x128xf32>
    %72 = math.rsqrt %71 : vector<1x128xf32>
    %73 = vector.broadcast %72 : vector<1x128xf32> to vector<8x128xf32>
    %74 = arith.mulf %64, %73 : vector<8x128xf32>
    %75 = vector.broadcast %54 : vector<1x128xf32> to vector<8x128xf32>
    %76 = arith.mulf %74, %75 : vector<8x128xf32>
    %77 = vector.broadcast %55 : vector<1x128xf32> to vector<8x128xf32>
    %78 = arith.addf %76, %77 : vector<8x128xf32>
    %cst_31 = arith.constant 0.000000e+00 : f32
    %79 = vector.broadcast %cst_31 : f32 to vector<8x128xf32>
    %80 = arith.maximumf %78, %79 : vector<8x128xf32>
    %81 = vector.extract_strided_slice %57 {offsets = [8, 0], sizes = [8, 128], strides = [1, 1]} : vector<16x128xf32> to vector<8x128xf32>
    %cst_32 = arith.constant dense<0.000000e+00> : vector<128xf32>
    %82 = vector.multi_reduction <add>, %81, %cst_32 [0] : vector<8x128xf32> to vector<128xf32>
    %83 = vector.shape_cast %82 : vector<128xf32> to vector<1x128xf32>
    %cst_33 = arith.constant 8.000000e+00 : f32
    %84 = vector.broadcast %cst_33 : f32 to vector<1x128xf32>
    %85 = arith.divf %83, %84 : vector<1x128xf32>
    %86 = vector.broadcast %85 : vector<1x128xf32> to vector<8x128xf32>
    %87 = arith.subf %81, %86 : vector<8x128xf32>
    %88 = arith.mulf %87, %87 : vector<8x128xf32>
    %cst_34 = arith.constant dense<0.000000e+00> : vector<128xf32>
    %89 = vector.multi_reduction <add>, %88, %cst_34 [0] : vector<8x128xf32> to vector<128xf32>
    %90 = vector.shape_cast %89 : vector<128xf32> to vector<1x128xf32>
    %cst_35 = arith.constant 8.000000e+00 : f32
    %91 = vector.broadcast %cst_35 : f32 to vector<1x128xf32>
    %92 = arith.divf %90, %91 : vector<1x128xf32>
    %cst_36 = arith.constant 9.99999974E-6 : f32
    %93 = vector.broadcast %cst_36 : f32 to vector<1x128xf32>
    %94 = arith.addf %92, %93 : vector<1x128xf32>
    %95 = math.rsqrt %94 : vector<1x128xf32>
    %96 = vector.broadcast %95 : vector<1x128xf32> to vector<8x128xf32>
    %97 = arith.mulf %87, %96 : vector<8x128xf32>
    %98 = vector.broadcast %54 : vector<1x128xf32> to vector<8x128xf32>
    %99 = arith.mulf %97, %98 : vector<8x128xf32>
    %100 = vector.broadcast %55 : vector<1x128xf32> to vector<8x128xf32>
    %101 = arith.addf %99, %100 : vector<8x128xf32>
    %cst_37 = arith.constant 0.000000e+00 : f32
    %102 = vector.broadcast %cst_37 : f32 to vector<8x128xf32>
    %103 = arith.maximumf %101, %102 : vector<8x128xf32>
    %104 = tpu.concatenate %80, %103 in 0 : vector<8x128xf32>, vector<8x128xf32> -> vector<16x128xf32>
    %105 = arith.truncf %104 : vector<16x128xf32> to vector<16x128xbf16>
    %c0_38 = arith.constant 0 : index
    %c0_39 = arith.constant 0 : index
    %106 = vector.load %arg7[%c0_38, %c0_39] : memref<128x128xbf16, #tpu.memory_space<vmem>>, vector<128x128xbf16>
    %cst_40 = arith.constant dense<0.000000e+00> : vector<16x128xf32>
    %107 = tpu.matmul %105, %106, %cst_40 {dimension_numbers = #tpu.dot_dimension_numbers<[1], [0], [0], [1], [0, 0, 1, 1], [], []>} : vector<16x128xbf16>, vector<128x128xbf16>, vector<16x128xf32> -> vector<16x128xf32>
    %108 = vector.extract_strided_slice %107 {offsets = [0, 0], sizes = [8, 128], strides = [1, 1]} : vector<16x128xf32> to vector<8x128xf32>
    %cst_41 = arith.constant dense<0.000000e+00> : vector<128xf32>
    %109 = vector.multi_reduction <add>, %108, %cst_41 [0] : vector<8x128xf32> to vector<128xf32>
    %110 = vector.shape_cast %109 : vector<128xf32> to vector<1x128xf32>
    %cst_42 = arith.constant 8.000000e+00 : f32
    %111 = vector.broadcast %cst_42 : f32 to vector<1x128xf32>
    %112 = arith.divf %110, %111 : vector<1x128xf32>
    %113 = vector.broadcast %112 : vector<1x128xf32> to vector<8x128xf32>
    %114 = arith.subf %108, %113 : vector<8x128xf32>
    %115 = arith.mulf %114, %114 : vector<8x128xf32>
    %cst_43 = arith.constant dense<0.000000e+00> : vector<128xf32>
    %116 = vector.multi_reduction <add>, %115, %cst_43 [0] : vector<8x128xf32> to vector<128xf32>
    %117 = vector.shape_cast %116 : vector<128xf32> to vector<1x128xf32>
    %cst_44 = arith.constant 8.000000e+00 : f32
    %118 = vector.broadcast %cst_44 : f32 to vector<1x128xf32>
    %119 = arith.divf %117, %118 : vector<1x128xf32>
    %cst_45 = arith.constant 9.99999974E-6 : f32
    %120 = vector.broadcast %cst_45 : f32 to vector<1x128xf32>
    %121 = arith.addf %119, %120 : vector<1x128xf32>
    %122 = math.rsqrt %121 : vector<1x128xf32>
    %123 = vector.broadcast %122 : vector<1x128xf32> to vector<8x128xf32>
    %124 = arith.mulf %114, %123 : vector<8x128xf32>
    %125 = vector.extract_strided_slice %107 {offsets = [8, 0], sizes = [8, 128], strides = [1, 1]} : vector<16x128xf32> to vector<8x128xf32>
    %cst_46 = arith.constant dense<0.000000e+00> : vector<128xf32>
    %126 = vector.multi_reduction <add>, %125, %cst_46 [0] : vector<8x128xf32> to vector<128xf32>
    %127 = vector.shape_cast %126 : vector<128xf32> to vector<1x128xf32>
    %cst_47 = arith.constant 8.000000e+00 : f32
    %128 = vector.broadcast %cst_47 : f32 to vector<1x128xf32>
    %129 = arith.divf %127, %128 : vector<1x128xf32>
    %130 = vector.broadcast %129 : vector<1x128xf32> to vector<8x128xf32>
    %131 = arith.subf %125, %130 : vector<8x128xf32>
    %132 = arith.mulf %131, %131 : vector<8x128xf32>
    %cst_48 = arith.constant dense<0.000000e+00> : vector<128xf32>
    %133 = vector.multi_reduction <add>, %132, %cst_48 [0] : vector<8x128xf32> to vector<128xf32>
    %134 = vector.shape_cast %133 : vector<128xf32> to vector<1x128xf32>
    %cst_49 = arith.constant 8.000000e+00 : f32
    %135 = vector.broadcast %cst_49 : f32 to vector<1x128xf32>
    %136 = arith.divf %134, %135 : vector<1x128xf32>
    %cst_50 = arith.constant 9.99999974E-6 : f32
    %137 = vector.broadcast %cst_50 : f32 to vector<1x128xf32>
    %138 = arith.addf %136, %137 : vector<1x128xf32>
    %139 = math.rsqrt %138 : vector<1x128xf32>
    %140 = vector.broadcast %139 : vector<1x128xf32> to vector<8x128xf32>
    %141 = arith.mulf %131, %140 : vector<8x128xf32>
    %cst_51 = arith.constant dense<0.000000e+00> : vector<128x128xf32>
    %142 = tpu.matmul %124, %141, %cst_51 {dimension_numbers = #tpu.dot_dimension_numbers<[0], [0], [1], [1], [0, 1, 1, 1], [], []>} : vector<8x128xf32>, vector<8x128xf32>, vector<128x128xf32> -> vector<128x128xf32>
    %cst_52 = arith.constant 1.250000e-01 : f32
    %143 = vector.broadcast %cst_52 : f32 to vector<128x128xf32>
    %144 = arith.mulf %142, %143 : vector<128x128xf32>
    %145 = tpu.iota {dimensions = array<i32: 0>} : vector<128x128xi32>
    %146 = tpu.iota {dimensions = array<i32: 1>} : vector<128x128xi32>
    %147 = arith.cmpi eq, %145, %146 : vector<128x128xi32>
    %148 = arith.mulf %144, %144 : vector<128x128xf32>
    %149 = vector.shape_cast %148 : vector<128x128xf32> to vector<1x128x128xf32>
    %cst_53 = arith.constant dense<0.000000e+00> : vector<1xf32>
    %150 = vector.multi_reduction <add>, %149, %cst_53 [1, 2] : vector<1x128x128xf32> to vector<1xf32>
    %151 = vector.shape_cast %150 : vector<1xf32> to vector<1x1x1xf32>
    %152 = vector.extract %151[0, 0, 0] : f32 from vector<1x1x1xf32>
    %153 = vector.broadcast %152 : f32 to vector<1x1xf32>
    %cst_54 = arith.constant 0.000000e+00 : f32
    %154 = vector.broadcast %cst_54 : f32 to vector<128x128xf32>
    %155 = arith.select %147, %148, %154 : vector<128x128xi1>, vector<128x128xf32>
    %156 = vector.shape_cast %155 : vector<128x128xf32> to vector<1x128x128xf32>
    %cst_55 = arith.constant dense<0.000000e+00> : vector<1xf32>
    %157 = vector.multi_reduction <add>, %156, %cst_55 [1, 2] : vector<1x128x128xf32> to vector<1xf32>
    %158 = vector.shape_cast %157 : vector<1xf32> to vector<1x1x1xf32>
    %159 = vector.extract %158[0, 0, 0] : f32 from vector<1x1x1xf32>
    %160 = vector.broadcast %159 : f32 to vector<1x1xf32>
    %cst_56 = arith.constant 0.000000e+00 : f32
    %161 = vector.broadcast %cst_56 : f32 to vector<128x128xf32>
    %162 = arith.select %147, %144, %161 : vector<128x128xi1>, vector<128x128xf32>
    %163 = vector.shape_cast %162 : vector<128x128xf32> to vector<1x128x128xf32>
    %cst_57 = arith.constant dense<0.000000e+00> : vector<1xf32>
    %164 = vector.multi_reduction <add>, %163, %cst_57 [1, 2] : vector<1x128x128xf32> to vector<1xf32>
    %165 = vector.shape_cast %164 : vector<1xf32> to vector<1x1x1xf32>
    %166 = vector.extract %165[0, 0, 0] : f32 from vector<1x1x1xf32>
    %167 = vector.broadcast %166 : f32 to vector<1x1xf32>
    %cst_58 = arith.constant 2.000000e+00 : f32
    %168 = vector.broadcast %cst_58 : f32 to vector<1x1xf32>
    %169 = arith.mulf %168, %167 : vector<1x1xf32>
    %170 = arith.subf %160, %169 : vector<1x1xf32>
    %cst_59 = arith.constant 1.280000e+02 : f32
    %171 = vector.broadcast %cst_59 : f32 to vector<1x1xf32>
    %172 = arith.addf %170, %171 : vector<1x1xf32>
    %173 = arith.subf %153, %160 : vector<1x1xf32>
    %cst_60 = arith.constant 5.100000e-03 : f32
    %174 = vector.broadcast %cst_60 : f32 to vector<1x1xf32>
    %175 = arith.mulf %174, %173 : vector<1x1xf32>
    %176 = arith.addf %172, %175 : vector<1x1xf32>
    %cst_61 = arith.constant 1.000000e+00 : f32
    %177 = vector.broadcast %cst_61 : f32 to vector<1x128xf32>
    %178 = vector.broadcast %176 : vector<1x1xf32> to vector<1x128xf32>
    %179 = arith.mulf %178, %177 : vector<1x128xf32>
    %c0_62 = arith.constant 0 : index
    %c0_63 = arith.constant 0 : index
    %180 = vector.load %arg8[%c0_62, %c0_63] : memref<1x128xf32, #tpu.memory_space<vmem>>, vector<1x128xf32>
    tpu.vector_store %arg8[%c0_62, %c0_63], %179 {strides = array<i32>} : memref<1x128xf32, #tpu.memory_space<vmem>>, vector<1x128xf32>,
    return
  }
}

</mosaic_0001>

<llo_original>
// kernel: tpu_custom_call.1
$region0: #{tpu_custom_call.1}
  #allocation0 [shape = 'u32[]', space=smem, size = 0x4, offset = 0x4, fixed_abs, tag = 'smem constant byte address 0x4 - core index']
  #allocation1 [shape = 'u32[144,128]{1,0:T(1,128)}', space=vmem, size = 0x12000, scoped, tag = 'internal scratch']
  %s0 = inlined_call_operand.hbm [shape: f32[16,1024], index: 0, kind: input, shape index: {}]
  %s1 = inlined_call_operand.hbm [shape: bf16[1024,128], index: 1, kind: input, shape index: {}]
  %s2 = inlined_call_operand.vmem [shape: f32[1,128], index: 2, kind: input, shape index: {}]
  %s3 = inlined_call_operand.vmem [shape: f32[1,128], index: 3, kind: input, shape index: {}]
  %s4 = inlined_call_operand.hbm [shape: bf16[128,128], index: 4, kind: input, shape index: {}]
  %s5 = inlined_call_operand.vmem [shape: f32[1,128], index: 5, kind: input, shape index: {}]
  %s6 = inlined_call_operand.vmem [shape: f32[1,128], index: 6, kind: input, shape index: {}]
  %s7 = inlined_call_operand.hbm [shape: bf16[128,128], index: 7, kind: input, shape index: {}]
  %s8 = inlined_call_operand.hbm [shape: f32[1,128], index: 8, kind: output, shape index: {}]
  %s9 = sld [smem:[#allocation0]]
  $region58: #{tpu_custom_call.1} parent=0
    _
  %s11 = ssub.s32 1, %s9
  %s12 = scalar_select 0, %s11, %s9
  $region1: #{tpu_custom_call.1} parent=0
    #allocation2 [shape = 'u8[65536]{0}', space=vmem, size = 0x10000, scoped, tag = 'input window, operand 0, single buffered']
    #allocation3 [shape = 's32[1]{0}', space=sflag, size = 0x4, scoped, tag = 'scoped memory for tpu_custom_call.1']
    #allocation4 [shape = 's32[1]{0}', space=sflag, size = 0x4, scoped, tag = 'scoped memory for tpu_custom_call.1']
    #allocation5 [shape = 'u8[262144]{0}', space=vmem, size = 0x40000, scoped, tag = 'input window, operand 1, single buffered']
    #allocation6 [shape = 's32[1]{0}', space=sflag, size = 0x4, scoped, tag = 'scoped memory for tpu_custom_call.1']
    #allocation7 [shape = 'u8[32768]{0}', space=vmem, size = 0x8000, scoped, tag = 'input window, operand 4, single buffered']
    #allocation8 [shape = 'u8[32768]{0}', space=vmem, size = 0x8000, scoped, tag = 'input window, operand 7, single buffered']
    #allocation9 [shape = 's32[1]{0}', space=sflag, size = 0x4, scoped, tag = 'scoped memory for tpu_custom_call.1']
    #allocation10 [shape = 'u8[512]{0}', space=vmem, size = 0x400, scoped, tag = 'output window, operand 0, single buffered']
    %13 = vsyncpa [#allocation3], 0
    %14 = vsyncpa [#allocation6], 0
    %15 = vsyncpa [#allocation9], 0
    %16 = vsyncpa [#allocation4], 0
    // Predicated region
    $region2: #{tpu_custom_call.1} parent=1 // pred_check
      _
    $region3: #{tpu_custom_call.1} parent=1 // pred_check_branch
      %18 = sbr.rel (0) target = $region5
    $region4: #{tpu_custom_call.1} parent=1 // pred_region
      %s20 = ssub.s32 2048, 2048
      %21 = vsyncadd [#allocation3], %s20
      %s22 = sshll.u32 [#allocation2], 4
      %s23 = int_to_ptr.vmem [resolvable:$true] %s22
      %28 = dma.hbm_to_vmem [thread:$0]  %s0, 2048, %s23, [#allocation3], 1024, 1024, 64
    $region5: #{tpu_custom_call.1} parent=1 // pred_fallthru
      _
    // Predicated region
    $region6: #{tpu_custom_call.1} parent=1 // pred_check
      _
    $region7: #{tpu_custom_call.1} parent=1 // pred_check_branch
      %30 = sbr.rel (0) target = $region9
    $region8: #{tpu_custom_call.1} parent=1 // pred_region
      %s32 = ssub.s32 8192, 8192
      %33 = vsyncadd [#allocation6], %s32
      %s34 = sshll.u32 [#allocation5], 4
      %s35 = int_to_ptr.vmem [resolvable:$true] %s34
      %40 = dma.hbm_to_vmem [thread:$0]  %s1, 8192, %s35, [#allocation6], 64, 64, 4
    $region9: #{tpu_custom_call.1} parent=1 // pred_fallthru
      _
    // Predicated region
    $region10: #{tpu_custom_call.1} parent=1 // pred_check
      _
    $region11: #{tpu_custom_call.1} parent=1 // pred_check_branch
      %42 = sbr.rel (0) target = $region13
    $region12: #{tpu_custom_call.1} parent=1 // pred_region
      _
    $region13: #{tpu_custom_call.1} parent=1 // pred_fallthru
      _
    // Predicated region
    $region14: #{tpu_custom_call.1} parent=1 // pred_check
      _
    $region15: #{tpu_custom_call.1} parent=1 // pred_check_branch
      %44 = sbr.rel (0) target = $region17
    $region16: #{tpu_custom_call.1} parent=1 // pred_region
      _
    $region17: #{tpu_custom_call.1} parent=1 // pred_fallthru
      _
    // Predicated region
    $region18: #{tpu_custom_call.1} parent=1 // pred_check
      _
    $region19: #{tpu_custom_call.1} parent=1 // pred_check_branch
      %46 = sbr.rel (0) target = $region21
    $region20: #{tpu_custom_call.1} parent=1 // pred_region
      %s48 = ssub.s32 1024, 1024
      %49 = vsyncadd [#allocation6], %s48
      %s50 = sshll.u32 [#allocation7], 4
      %s51 = int_to_ptr.vmem [resolvable:$true] %s50
      %56 = dma.hbm_to_vmem [thread:$0]  %s4, 1024, %s51, [#allocation6], 64, 64, 4
    $region21: #{tpu_custom_call.1} parent=1 // pred_fallthru
      _
    // Predicated region
    $region22: #{tpu_custom_call.1} parent=1 // pred_check
      _
    $region23: #{tpu_custom_call.1} parent=1 // pred_check_branch
      %58 = sbr.rel (0) target = $region25
    $region24: #{tpu_custom_call.1} parent=1 // pred_region
      _
    $region25: #{tpu_custom_call.1} parent=1 // pred_fallthru
      _
    // Predicated region
    $region26: #{tpu_custom_call.1} parent=1 // pred_check
      _
    $region27: #{tpu_custom_call.1} parent=1 // pred_check_branch
      %60 = sbr.rel (0) target = $region29
    $region28: #{tpu_custom_call.1} parent=1 // pred_region
      _
    $region29: #{tpu_custom_call.1} parent=1 // pred_fallthru
      _
    // Predicated region
    $region30: #{tpu_custom_call.1} parent=1 // pred_check
      _
    $region31: #{tpu_custom_call.1} parent=1 // pred_check_branch
      %62 = sbr.rel (0) target = $region33
    $region32: #{tpu_custom_call.1} parent=1 // pred_region
      %s64 = ssub.s32 1024, 1024
      %65 = vsyncadd [#allocation9], %s64
      %s66 = sshll.u32 [#allocation8], 4
      %s67 = int_to_ptr.vmem [resolvable:$true] %s66
      %72 = dma.hbm_to_vmem [thread:$0]  %s7, 1024, %s67, [#allocation9], 64, 64, 4
    $region33: #{tpu_custom_call.1} parent=1 // pred_fallthru
      _
    // Predicated region
    $region34: #{tpu_custom_call.1} parent=1 // pred_check
      _
    $region35: #{tpu_custom_call.1} parent=1 // pred_check_branch
      %74 = sbr.rel (0) target = $region37
    $region36: #{tpu_custom_call.1} parent=1 // pred_region
      %75 = dma.done [#allocation3], 2048
    $region37: #{tpu_custom_call.1} parent=1 // pred_fallthru
      _
    // Predicated region
    $region38: #{tpu_custom_call.1} parent=1 // pred_check
      _
    $region39: #{tpu_custom_call.1} parent=1 // pred_check_branch
      %77 = sbr.rel (0) target = $region41
    $region40: #{tpu_custom_call.1} parent=1 // pred_region
      %78 = dma.done [#allocation6], 8192
    $region41: #{tpu_custom_call.1} parent=1 // pred_fallthru
      _
    // Predicated region
    $region42: #{tpu_custom_call.1} parent=1 // pred_check
      _
    $region43: #{tpu_custom_call.1} parent=1 // pred_check_branch
      %80 = sbr.rel (0) target = $region45
    $region44: #{tpu_custom_call.1} parent=1 // pred_region
      %81 = dma.done [#allocation6], 1024
    $region45: #{tpu_custom_call.1} parent=1 // pred_fallthru
      _
    // Predicated region
    $region46: #{tpu_custom_call.1} parent=1 // pred_check
      _
    $region47: #{tpu_custom_call.1} parent=1 // pred_check_branch
      %83 = sbr.rel (0) target = $region49
    $region48: #{tpu_custom_call.1} parent=1 // pred_region
      %84 = dma.done [#allocation9], 1024
    $region49: #{tpu_custom_call.1} parent=1 // pred_fallthru
      _
    %v86 = vld [vmem:[#allocation2] sm:$0xff]
    %v87 = vld [vmem:[#allocation2 + $0x8] sm:$0xff]
    %v88 = vld [vmem:[#allocation2 + $0x10] sm:$0xff]
    %v89 = vld [vmem:[#allocation2 + $0x18] sm:$0xff]
    %v90 = vld [vmem:[#allocation2 + $0x20] sm:$0xff]
    %v91 = vld [vmem:[#allocation2 + $0x28] sm:$0xff]
    %v92 = vld [vmem:[#allocation2 + $0x30] sm:$0xff]
    %v93 = vld [vmem:[#allocation2 + $0x38] sm:$0xff]
    %v94 = vld [vmem:[#allocation2 + $0x40] sm:$0xff]
    %v95 = vld [vmem:[#allocation2 + $0x48] sm:$0xff]
    %v96 = vld [vmem:[#allocation2 + $0x50] sm:$0xff]
    %v97 = vld [vmem:[#allocation2 + $0x58] sm:$0xff]
    %v98 = vld [vmem:[#allocation2 + $0x60] sm:$0xff]
    %v99 = vld [vmem:[#allocation2 + $0x68] sm:$0xff]
    %v100 = vld [vmem:[#allocation2 + $0x70] sm:$0xff]
    %v101 = vld [vmem:[#allocation2 + $0x78] sm:$0xff]
    %v102 = vld [vmem:[#allocation5] sm:$0xf]
    %v103 = vld [vmem:[#allocation5 + $0x4] sm:$0xf]
    %v104 = vld [vmem:[#allocation5 + $0x8] sm:$0xf]
    %v105 = vld [vmem:[#allocation5 + $0xc] sm:$0xf]
    %v106 = vld [vmem:[#allocation5 + $0x10] sm:$0xf]
    %v107 = vld [vmem:[#allocation5 + $0x14] sm:$0xf]
    %v108 = vld [vmem:[#allocation5 + $0x18] sm:$0xf]
    %v109 = vld [vmem:[#allocation5 + $0x1c] sm:$0xf]
    %v110 = vld [vmem:[#allocation5 + $0x20] sm:$0xf]
    %v111 = vld [vmem:[#allocation5 + $0x24] sm:$0xf]
    %v112 = vld [vmem:[#allocation5 + $0x28] sm:$0xf]
    %v113 = vld [vmem:[#allocation5 + $0x2c] sm:$0xf]
    %v114 = vld [vmem:[#allocation5 + $0x30] sm:$0xf]
    %v115 = vld [vmem:[#allocation5 + $0x34] sm:$0xf]
    %v116 = vld [vmem:[#allocation5 + $0x38] sm:$0xf]
    %v117 = vld [vmem:[#allocation5 + $0x3c] sm:$0xf]
    %v118 = vld [vmem:[#allocation5 + $0x40] sm:$0xf]
    %v119 = vld [vmem:[#allocation5 + $0x44] sm:$0xf]
    %v120 = vld [vmem:[#allocation5 + $0x48] sm:$0xf]
    %v121 = vld [vmem:[#allocation5 + $0x4c] sm:$0xf]
    %v122 = vld [vmem:[#allocation5 + $0x50] sm:$0xf]
    %v123 = vld [vmem:[#allocation5 + $0x54] sm:$0xf]
    %v124 = vld [vmem:[#allocation5 + $0x58] sm:$0xf]
    %v125 = vld [vmem:[#allocation5 + $0x5c] sm:$0xf]
    %v126 = vld [vmem:[#allocation5 + $0x60] sm:$0xf]
    %v127 = vld [vmem:[#allocation5 + $0x64] sm:$0xf]
    %v128 = vld [vmem:[#allocation5 + $0x68] sm:$0xf]
    %v129 = vld [vmem:[#allocation5 + $0x6c] sm:$0xf]
    %v130 = vld [vmem:[#allocation5 + $0x70] sm:$0xf]
    %v131 = vld [vmem:[#allocation5 + $0x74] sm:$0xf]
    %v132 = vld [vmem:[#allocation5 + $0x78] sm:$0xf]
    %v133 = vld [vmem:[#allocation5 + $0x7c] sm:$0xf]
    %v134 = vld [vmem:[#allocation5 + $0x80] sm:$0xf]
    %v135 = vld [vmem:[#allocation5 + $0x84] sm:$0xf]
    %v136 = vld [vmem:[#allocation5 + $0x88] sm:$0xf]
    %v137 = vld [vmem:[#allocation5 + $0x8c] sm:$0xf]
    %v138 = vld [vmem:[#allocation5 + $0x90] sm:$0xf]
    %v139 = vld [vmem:[#allocation5 + $0x94] sm:$0xf]
    %v140 = vld [vmem:[#allocation5 + $0x98] sm:$0xf]
    %v141 = vld [vmem:[#allocation5 + $0x9c] sm:$0xf]
    %v142 = vld [vmem:[#allocation5 + $0xa0] sm:$0xf]
    %v143 = vld [vmem:[#allocation5 + $0xa4] sm:$0xf]
    %v144 = vld [vmem:[#allocation5 + $0xa8] sm:$0xf]
    %v145 = vld [vmem:[#allocation5 + $0xac] sm:$0xf]
    %v146 = vld [vmem:[#allocation5 + $0xb0] sm:$0xf]
    %v147 = vld [vmem:[#allocation5 + $0xb4] sm:$0xf]
    %v148 = vld [vmem:[#allocation5 + $0xb8] sm:$0xf]
    %v149 = vld [vmem:[#allocation5 + $0xbc] sm:$0xf]
    %v150 = vld [vmem:[#allocation5 + $0xc0] sm:$0xf]
    %v151 = vld [vmem:[#allocation5 + $0xc4] sm:$0xf]
    %v152 = vld [vmem:[#allocation5 + $0xc8] sm:$0xf]
    %v153 = vld [vmem:[#allocation5 + $0xcc] sm:$0xf]
    %v154 = vld [vmem:[#allocation5 + $0xd0] sm:$0xf]
    %v155 = vld [vmem:[#allocation5 + $0xd4] sm:$0xf]
    %v156 = vld [vmem:[#allocation5 + $0xd8] sm:$0xf]
    %v157 = vld [vmem:[#allocation5 + $0xdc] sm:$0xf]
    %v158 = vld [vmem:[#allocation5 + $0xe0] sm:$0xf]
    %v159 = vld [vmem:[#allocation5 + $0xe4] sm:$0xf]
    %v160 = vld [vmem:[#allocation5 + $0xe8] sm:$0xf]
    %v161 = vld [vmem:[#allocation5 + $0xec] sm:$0xf]
    %v162 = vld [vmem:[#allocation5 + $0xf0] sm:$0xf]
    %v163 = vld [vmem:[#allocation5 + $0xf4] sm:$0xf]
    %v164 = vld [vmem:[#allocation5 + $0xf8] sm:$0xf]
    %v165 = vld [vmem:[#allocation5 + $0xfc] sm:$0xf]
    %v166 = vld [vmem:[#allocation5 + $0x100] sm:$0xf]
    %v167 = vld [vmem:[#allocation5 + $0x104] sm:$0xf]
    %v168 = vld [vmem:[#allocation5 + $0x108] sm:$0xf]
    %v169 = vld [vmem:[#allocation5 + $0x10c] sm:$0xf]
    %v170 = vld [vmem:[#allocation5 + $0x110] sm:$0xf]
    %v171 = vld [vmem:[#allocation5 + $0x114] sm:$0xf]
    %v172 = vld [vmem:[#allocation5 + $0x118] sm:$0xf]
    %v173 = vld [vmem:[#allocation5 + $0x11c] sm:$0xf]
    %v174 = vld [vmem:[#allocation5 + $0x120] sm:$0xf]
    %v175 = vld [vmem:[#allocation5 + $0x124] sm:$0xf]
    %v176 = vld [vmem:[#allocation5 + $0x128] sm:$0xf]
    %v177 = vld [vmem:[#allocation5 + $0x12c] sm:$0xf]
    %v178 = vld [vmem:[#allocation5 + $0x130] sm:$0xf]
    %v179 = vld [vmem:[#allocation5 + $0x134] sm:$0xf]
    %v180 = vld [vmem:[#allocation5 + $0x138] sm:$0xf]
    %v181 = vld [vmem:[#allocation5 + $0x13c] sm:$0xf]
    %v182 = vld [vmem:[#allocation5 + $0x140] sm:$0xf]
    %v183 = vld [vmem:[#allocation5 + $0x144] sm:$0xf]
    %v184 = vld [vmem:[#allocation5 + $0x148] sm:$0xf]
    %v185 = vld [vmem:[#allocation5 + $0x14c] sm:$0xf]
    %v186 = vld [vmem:[#allocation5 + $0x150] sm:$0xf]
    %v187 = vld [vmem:[#allocation5 + $0x154] sm:$0xf]
    %v188 = vld [vmem:[#allocation5 + $0x158] sm:$0xf]
    %v189 = vld [vmem:[#allocation5 + $0x15c] sm:$0xf]
    %v190 = vld [vmem:[#allocation5 + $0x160] sm:$0xf]
    %v191 = vld [vmem:[#allocation5 + $0x164] sm:$0xf]
    %v192 = vld [vmem:[#allocation5 + $0x168] sm:$0xf]
    %v193 = vld [vmem:[#allocation5 + $0x16c] sm:$0xf]
    %v194 = vld [vmem:[#allocation5 + $0x170] sm:$0xf]
    %v195 = vld [vmem:[#allocation5 + $0x174] sm:$0xf]
    %v196 = vld [vmem:[#allocation5 + $0x178] sm:$0xf]
    %v197 = vld [vmem:[#allocation5 + $0x17c] sm:$0xf]
    %v198 = vld [vmem:[#allocation5 + $0x180] sm:$0xf]
    %v199 = vld [vmem:[#allocation5 + $0x184] sm:$0xf]
    %v200 = vld [vmem:[#allocation5 + $0x188] sm:$0xf]
    %v201 = vld [vmem:[#allocation5 + $0x18c] sm:$0xf]
    %v202 = vld [vmem:[#allocation5 + $0x190] sm:$0xf]
    %v203 = vld [vmem:[#allocation5 + $0x194] sm:$0xf]
    %v204 = vld [vmem:[#allocation5 + $0x198] sm:$0xf]
    %v205 = vld [vmem:[#allocation5 + $0x19c] sm:$0xf]
    %v206 = vld [vmem:[#allocation5 + $0x1a0] sm:$0xf]
    %v207 = vld [vmem:[#allocation5 + $0x1a4] sm:$0xf]
    %v208 = vld [vmem:[#allocation5 + $0x1a8] sm:$0xf]
    %v209 = vld [vmem:[#allocation5 + $0x1ac] sm:$0xf]
    %v210 = vld [vmem:[#allocation5 + $0x1b0] sm:$0xf]
    %v211 = vld [vmem:[#allocation5 + $0x1b4] sm:$0xf]
    %v212 = vld [vmem:[#allocation5 + $0x1b8] sm:$0xf]
    %v213 = vld [vmem:[#allocation5 + $0x1bc] sm:$0xf]
    %v214 = vld [vmem:[#allocation5 + $0x1c0] sm:$0xf]
    %v215 = vld [vmem:[#allocation5 + $0x1c4] sm:$0xf]
    %v216 = vld [vmem:[#allocation5 + $0x1c8] sm:$0xf]
    %v217 = vld [vmem:[#allocation5 + $0x1cc] sm:$0xf]
    %v218 = vld [vmem:[#allocation5 + $0x1d0] sm:$0xf]
    %v219 = vld [vmem:[#allocation5 + $0x1d4] sm:$0xf]
    %v220 = vld [vmem:[#allocation5 + $0x1d8] sm:$0xf]
    %v221 = vld [vmem:[#allocation5 + $0x1dc] sm:$0xf]
    %v222 = vld [vmem:[#allocation5 + $0x1e0] sm:$0xf]
    %v223 = vld [vmem:[#allocation5 + $0x1e4] sm:$0xf]
    %v224 = vld [vmem:[#allocation5 + $0x1e8] sm:$0xf]
    %v225 = vld [vmem:[#allocation5 + $0x1ec] sm:$0xf]
    %v226 = vld [vmem:[#allocation5 + $0x1f0] sm:$0xf]
    %v227 = vld [vmem:[#allocation5 + $0x1f4] sm:$0xf]
    %v228 = vld [vmem:[#allocation5 + $0x1f8] sm:$0xf]
    %v229 = vld [vmem:[#allocation5 + $0x1fc] sm:$0xf]
    %v230 = vld [vmem:[%s2] sm:$0x1]
    %v231 = vld [vmem:[%s3] sm:$0x1]
    %v232 = vpack.c.bf16 %v94, %v86
    %v233 = vpack.c.bf16 %v95, %v87
    %v234 = vpack.c.bf16 %v96, %v88
    %v235 = vpack.c.bf16 %v97, %v89
    %v236 = vpack.c.bf16 %v98, %v90
    %v237 = vpack.c.bf16 %v99, %v91
    %v238 = vpack.c.bf16 %v100, %v92
    %v239 = vpack.c.bf16 %v101, %v93
    %v368 = vunpack.c.l.b16 %v102
    %v369 = vunpack.c.l.b16 %v103
    %v370 = vunpack.c.l.b16 %v104
    %v371 = vunpack.c.l.b16 %v105
    %v372 = vunpack.c.l.b16 %v106
    %v373 = vunpack.c.l.b16 %v107
    %v374 = vunpack.c.l.b16 %v108
    %v375 = vunpack.c.l.b16 %v109
    %v376 = vunpack.c.l.b16 %v110
    %v377 = vunpack.c.l.b16 %v111
    %v378 = vunpack.c.l.b16 %v112
    %v379 = vunpack.c.l.b16 %v113
    %v380 = vunpack.c.l.b16 %v114
    %v381 = vunpack.c.l.b16 %v115
    %v382 = vunpack.c.l.b16 %v116
    %v383 = vunpack.c.l.b16 %v117
    %v384 = vunpack.c.l.b16 %v118
    %v385 = vunpack.c.l.b16 %v119
    %v386 = vunpack.c.l.b16 %v120
    %v387 = vunpack.c.l.b16 %v121
    %v388 = vunpack.c.l.b16 %v122
    %v389 = vunpack.c.l.b16 %v123
    %v390 = vunpack.c.l.b16 %v124
    %v391 = vunpack.c.l.b16 %v125
    %v392 = vunpack.c.l.b16 %v126
    %v393 = vunpack.c.l.b16 %v127
    %v394 = vunpack.c.l.b16 %v128
    %v395 = vunpack.c.l.b16 %v129
    %v396 = vunpack.c.l.b16 %v130
    %v397 = vunpack.c.l.b16 %v131
    %v398 = vunpack.c.l.b16 %v132
    %v399 = vunpack.c.l.b16 %v133
    %v400 = vunpack.c.l.b16 %v134
    %v401 = vunpack.c.l.b16 %v135
    %v402 = vunpack.c.l.b16 %v136
    %v403 = vunpack.c.l.b16 %v137
    %v404 = vunpack.c.l.b16 %v138
    %v405 = vunpack.c.l.b16 %v139
    %v406 = vunpack.c.l.b16 %v140
    %v407 = vunpack.c.l.b16 %v141
    %v408 = vunpack.c.l.b16 %v142
    %v409 = vunpack.c.l.b16 %v143
    %v410 = vunpack.c.l.b16 %v144
    %v411 = vunpack.c.l.b16 %v145
    %v412 = vunpack.c.l.b16 %v146
    %v413 = vunpack.c.l.b16 %v147
    %v414 = vunpack.c.l.b16 %v148
    %v415 = vunpack.c.l.b16 %v149
    %v416 = vunpack.c.l.b16 %v150
    %v417 = vunpack.c.l.b16 %v151
    %v418 = vunpack.c.l.b16 %v152
    %v419 = vunpack.c.l.b16 %v153
    %v420 = vunpack.c.l.b16 %v154
    %v421 = vunpack.c.l.b16 %v155
    %v422 = vunpack.c.l.b16 %v156
    %v423 = vunpack.c.l.b16 %v157
    %v424 = vunpack.c.l.b16 %v158
    %v425 = vunpack.c.l.b16 %v159
    %v426 = vunpack.c.l.b16 %v160
    %v427 = vunpack.c.l.b16 %v161
    %v428 = vunpack.c.l.b16 %v162
    %v429 = vunpack.c.l.b16 %v163
    %v430 = vunpack.c.l.b16 %v164
    %v431 = vunpack.c.l.b16 %v165
    %v432 = vunpack.c.l.b16 %v166
    %v433 = vunpack.c.l.b16 %v167
    %v434 = vunpack.c.l.b16 %v168
    %v435 = vunpack.c.l.b16 %v169
    %v436 = vunpack.c.l.b16 %v170
    %v437 = vunpack.c.l.b16 %v171
    %v438 = vunpack.c.l.b16 %v172
    %v439 = vunpack.c.l.b16 %v173
    %v440 = vunpack.c.l.b16 %v174
    %v441 = vunpack.c.l.b16 %v175
    %v442 = vunpack.c.l.b16 %v176
    %v443 = vunpack.c.l.b16 %v177
    %v444 = vunpack.c.l.b16 %v178
    %v445 = vunpack.c.l.b16 %v179
    %v446 = vunpack.c.l.b16 %v180
    %v447 = vunpack.c.l.b16 %v181
    %v448 = vunpack.c.l.b16 %v182
    %v449 = vunpack.c.l.b16 %v183
    %v450 = vunpack.c.l.b16 %v184
    %v451 = vunpack.c.l.b16 %v185
    %v452 = vunpack.c.l.b16 %v186
    %v453 = vunpack.c.l.b16 %v187
    %v454 = vunpack.c.l.b16 %v188
    %v455 = vunpack.c.l.b16 %v189
    %v456 = vunpack.c.l.b16 %v190
    %v457 = vunpack.c.l.b16 %v191
    %v458 = vunpack.c.l.b16 %v192
    %v459 = vunpack.c.l.b16 %v193
    %v460 = vunpack.c.l.b16 %v194
    %v461 = vunpack.c.l.b16 %v195
    %v462 = vunpack.c.l.b16 %v196
    %v463 = vunpack.c.l.b16 %v197
    %v464 = vunpack.c.l.b16 %v198
    %v465 = vunpack.c.l.b16 %v199
    %v466 = vunpack.c.l.b16 %v200
    %v467 = vunpack.c.l.b16 %v201
    %v468 = vunpack.c.l.b16 %v202
    %v469 = vunpack.c.l.b16 %v203
    %v470 = vunpack.c.l.b16 %v204
    %v471 = vunpack.c.l.b16 %v205
    %v472 = vunpack.c.l.b16 %v206
    %v473 = vunpack.c.l.b16 %v207
    %v474 = vunpack.c.l.b16 %v208
    %v475 = vunpack.c.l.b16 %v209
    %v476 = vunpack.c.l.b16 %v210
    %v477 = vunpack.c.l.b16 %v211
    %v478 = vunpack.c.l.b16 %v212
    %v479 = vunpack.c.l.b16 %v213
    %v480 = vunpack.c.l.b16 %v214
    %v481 = vunpack.c.l.b16 %v215
    %v482 = vunpack.c.l.b16 %v216
    %v483 = vunpack.c.l.b16 %v217
    %v484 = vunpack.c.l.b16 %v218
    %v485 = vunpack.c.l.b16 %v219
    %v486 = vunpack.c.l.b16 %v220
    %v487 = vunpack.c.l.b16 %v221
    %v488 = vunpack.c.l.b16 %v222
    %v489 = vunpack.c.l.b16 %v223
    %v490 = vunpack.c.l.b16 %v224
    %v491 = vunpack.c.l.b16 %v225
    %v492 = vunpack.c.l.b16 %v226
    %v493 = vunpack.c.l.b16 %v227
    %v494 = vunpack.c.l.b16 %v228
    %v495 = vunpack.c.l.b16 %v229
    %v496 = vpack.c.b16 %v369, %v368
    %v497 = vpack.c.b16 %v371, %v370
    %v498 = vpack.c.b16 %v373, %v372
    %v499 = vpack.c.b16 %v375, %v374
    %v500 = vpack.c.b16 %v377, %v376
    %v501 = vpack.c.b16 %v379, %v378
    %v502 = vpack.c.b16 %v381, %v380
    %v503 = vpack.c.b16 %v383, %v382
    %v504 = vpack.c.b16 %v385, %v384
    %v505 = vpack.c.b16 %v387, %v386
    %v506 = vpack.c.b16 %v389, %v388
    %v507 = vpack.c.b16 %v391, %v390
    %v508 = vpack.c.b16 %v393, %v392
    %v509 = vpack.c.b16 %v395, %v394
    %v510 = vpack.c.b16 %v397, %v396
    %v511 = vpack.c.b16 %v399, %v398
    %v512 = vpack.c.b16 %v401, %v400
    %v513 = vpack.c.b16 %v403, %v402
    %v514 = vpack.c.b16 %v405, %v404
    %v515 = vpack.c.b16 %v407, %v406
    %v516 = vpack.c.b16 %v409, %v408
    %v517 = vpack.c.b16 %v411, %v410
    %v518 = vpack.c.b16 %v413, %v412
    %v519 = vpack.c.b16 %v415, %v414
    %v520 = vpack.c.b16 %v417, %v416
    %v521 = vpack.c.b16 %v419, %v418
    %v522 = vpack.c.b16 %v421, %v420
    %v523 = vpack.c.b16 %v423, %v422
    %v524 = vpack.c.b16 %v425, %v424
    %v525 = vpack.c.b16 %v427, %v426
    %v526 = vpack.c.b16 %v429, %v428
    %v527 = vpack.c.b16 %v431, %v430
    %v528 = vpack.c.b16 %v433, %v432
    %v529 = vpack.c.b16 %v435, %v434
    %v530 = vpack.c.b16 %v437, %v436
    %v531 = vpack.c.b16 %v439, %v438
    %v532 = vpack.c.b16 %v441, %v440
    %v533 = vpack.c.b16 %v443, %v442
    %v534 = vpack.c.b16 %v445, %v444
    %v535 = vpack.c.b16 %v447, %v446
    %v536 = vpack.c.b16 %v449, %v448
    %v537 = vpack.c.b16 %v451, %v450
    %v538 = vpack.c.b16 %v453, %v452
    %v539 = vpack.c.b16 %v455, %v454
    %v540 = vpack.c.b16 %v457, %v456
    %v541 = vpack.c.b16 %v459, %v458
    %v542 = vpack.c.b16 %v461, %v460
    %v543 = vpack.c.b16 %v463, %v462
    %v544 = vpack.c.b16 %v465, %v464
    %v545 = vpack.c.b16 %v467, %v466
    %v546 = vpack.c.b16 %v469, %v468
    %v547 = vpack.c.b16 %v471, %v470
    %v548 = vpack.c.b16 %v473, %v472
    %v549 = vpack.c.b16 %v475, %v474
    %v550 = vpack.c.b16 %v477, %v476
    %v551 = vpack.c.b16 %v479, %v478
    %v552 = vpack.c.b16 %v481, %v480
    %v553 = vpack.c.b16 %v483, %v482
    %v554 = vpack.c.b16 %v485, %v484
    %v555 = vpack.c.b16 %v487, %v486
    %v556 = vpack.c.b16 %v489, %v488
    %v557 = vpack.c.b16 %v491, %v490
    %v558 = vpack.c.b16 %v493, %v492
    %v559 = vpack.c.b16 %v495, %v494
    %624 = vmatprep.subr.bf16.mxu0 0
    %625 = vmatpush1.bf16.msra.mxu0 %v496
    %626 = vmatprep.subr.bf16.mxu0 0
    %627 = vmatpush1.bf16.msra.mxu0 %v497
    %628 = vmatprep.subr.bf16.mxu0 0
    %629 = vmatpush1.bf16.msra.mxu0 %v498
    %630 = vmatprep.subr.bf16.mxu0 0
    %631 = vmatpush1.bf16.msra.mxu0 %v499
    %632 = vmatprep.subr.bf16.mxu0 0
    %633 = vmatpush1.bf16.msra.mxu0 %v500
    %634 = vmatprep.subr.bf16.mxu0 0
    %635 = vmatpush1.bf16.msra.mxu0 %v501
    %636 = vmatprep.subr.bf16.mxu0 0
    %637 = vmatpush1.bf16.msra.mxu0 %v502
    %638 = vmatprep.subr.bf16.mxu0 0
    %639 = vmatpush1.bf16.msra.mxu0 %v503
    %640 = vmatprep.subr.bf16.mxu0 0
    %641 = vmatpush1.bf16.msra.mxu0 %v504
    %642 = vmatprep.subr.bf16.mxu0 0
    %643 = vmatpush1.bf16.msra.mxu0 %v505
    %644 = vmatprep.subr.bf16.mxu0 0
    %645 = vmatpush1.bf16.msra.mxu0 %v506
    %646 = vmatprep.subr.bf16.mxu0 0
    %647 = vmatpush1.bf16.msra.mxu0 %v507
    %648 = vmatprep.subr.bf16.mxu0 0
    %649 = vmatpush1.bf16.msra.mxu0 %v508
    %650 = vmatprep.subr.bf16.mxu0 0
    %651 = vmatpush1.bf16.msra.mxu0 %v509
    %652 = vmatprep.subr.bf16.mxu0 0
    %653 = vmatpush1.bf16.msra.mxu0 %v510
    %654 = vmatprep.subr.bf16.mxu0 0
    %655 = vmatpush1.bf16.msra.mxu0 %v511
    %656 = vmatprep.mubr.bf16.mxu0 %v233
    %657 = vmatmul.mubr.bf16.gmra.mrb[0].mxu0 %v232
    %v658 = vpop.f32.mrb[0].mxu0
    %v659 = vadd.f32 0.0, %v658
    %v660 = vpop.f32.mrb[0].mxu0
    %v661 = vpop.f32.mrb[0].mxu0
    %v662 = vadd.f32 0.0, %v661
    %v663 = vpop.f32.mrb[0].mxu0
    %664 = vdwg.mxu0
    %665 = vmatprep.subr.bf16.mxu0 0
    %666 = vmatpush1.bf16.msra.mxu0 %v512
    %667 = vmatprep.subr.bf16.mxu0 0
    %668 = vmatpush1.bf16.msra.mxu0 %v513
    %669 = vmatprep.subr.bf16.mxu0 0
    %670 = vmatpush1.bf16.msra.mxu0 %v514
    %671 = vmatprep.subr.bf16.mxu0 0
    %672 = vmatpush1.bf16.msra.mxu0 %v515
    %673 = vmatprep.subr.bf16.mxu0 0
    %674 = vmatpush1.bf16.msra.mxu0 %v516
    %675 = vmatprep.subr.bf16.mxu0 0
    %676 = vmatpush1.bf16.msra.mxu0 %v517
    %677 = vmatprep.subr.bf16.mxu0 0
    %678 = vmatpush1.bf16.msra.mxu0 %v518
    %679 = vmatprep.subr.bf16.mxu0 0
    %680 = vmatpush1.bf16.msra.mxu0 %v519
    %681 = vmatprep.subr.bf16.mxu0 0
    %682 = vmatpush1.bf16.msra.mxu0 %v520
    %683 = vmatprep.subr.bf16.mxu0 0
    %684 = vmatpush1.bf16.msra.mxu0 %v521
    %685 = vmatprep.subr.bf16.mxu0 0
    %686 = vmatpush1.bf16.msra.mxu0 %v522
    %687 = vmatprep.subr.bf16.mxu0 0
    %688 = vmatpush1.bf16.msra.mxu0 %v523
    %689 = vmatprep.subr.bf16.mxu0 0
    %690 = vmatpush1.bf16.msra.mxu0 %v524
    %691 = vmatprep.subr.bf16.mxu0 0
    %692 = vmatpush1.bf16.msra.mxu0 %v525
    %693 = vmatprep.subr.bf16.mxu0 0
    %694 = vmatpush1.bf16.msra.mxu0 %v526
    %695 = vmatprep.subr.bf16.mxu0 0
    %696 = vmatpush1.bf16.msra.mxu0 %v527
    %697 = vmatprep.mubr.bf16.mxu0 %v235
    %698 = vmatmul.mubr.bf16.gmra.mrb[0].mxu0 %v234
    %v699 = vpop.f32.mrb[0].mxu0
    %v700 = vadd.f32 %v659, %v699
    %v701 = vpop.f32.mrb[0].mxu0
    %v702 = vpop.f32.mrb[0].mxu0
    %v703 = vadd.f32 %v662, %v702
    %v704 = vpop.f32.mrb[0].mxu0
    %705 = vdwg.mxu0
    %706 = vmatprep.subr.bf16.mxu0 0
    %707 = vmatpush1.bf16.msra.mxu0 %v528
    %708 = vmatprep.subr.bf16.mxu0 0
    %709 = vmatpush1.bf16.msra.mxu0 %v529
    %710 = vmatprep.subr.bf16.mxu0 0
    %711 = vmatpush1.bf16.msra.mxu0 %v530
    %712 = vmatprep.subr.bf16.mxu0 0
    %713 = vmatpush1.bf16.msra.mxu0 %v531
    %714 = vmatprep.subr.bf16.mxu0 0
    %715 = vmatpush1.bf16.msra.mxu0 %v532
    %716 = vmatprep.subr.bf16.mxu0 0
    %717 = vmatpush1.bf16.msra.mxu0 %v533
    %718 = vmatprep.subr.bf16.mxu0 0
    %719 = vmatpush1.bf16.msra.mxu0 %v534
    %720 = vmatprep.subr.bf16.mxu0 0
    %721 = vmatpush1.bf16.msra.mxu0 %v535
    %722 = vmatprep.subr.bf16.mxu0 0
    %723 = vmatpush1.bf16.msra.mxu0 %v536
    %724 = vmatprep.subr.bf16.mxu0 0
    %725 = vmatpush1.bf16.msra.mxu0 %v537
    %726 = vmatprep.subr.bf16.mxu0 0
    %727 = vmatpush1.bf16.msra.mxu0 %v538
    %728 = vmatprep.subr.bf16.mxu0 0
    %729 = vmatpush1.bf16.msra.mxu0 %v539
    %730 = vmatprep.subr.bf16.mxu0 0
    %731 = vmatpush1.bf16.msra.mxu0 %v540
    %732 = vmatprep.subr.bf16.mxu0 0
    %733 = vmatpush1.bf16.msra.mxu0 %v541
    %734 = vmatprep.subr.bf16.mxu0 0
    %735 = vmatpush1.bf16.msra.mxu0 %v542
    %736 = vmatprep.subr.bf16.mxu0 0
    %737 = vmatpush1.bf16.msra.mxu0 %v543
    %738 = vmatprep.mubr.bf16.mxu0 %v237
    %739 = vmatmul.mubr.bf16.gmra.mrb[0].mxu0 %v236
    %v740 = vpop.f32.mrb[0].mxu0
    %v741 = vadd.f32 %v700, %v740
    %v742 = vpop.f32.mrb[0].mxu0
    %v743 = vpop.f32.mrb[0].mxu0
    %v744 = vadd.f32 %v703, %v743
    %v745 = vpop.f32.mrb[0].mxu0
    %746 = vdwg.mxu0
    %747 = vmatprep.subr.bf16.mxu0 0
    %748 = vmatpush1.bf16.msra.mxu0 %v544
    %749 = vmatprep.subr.bf16.mxu0 0
    %750 = vmatpush1.bf16.msra.mxu0 %v545
    %751 = vmatprep.subr.bf16.mxu0 0
    %752 = vmatpush1.bf16.msra.mxu0 %v546
    %753 = vmatprep.subr.bf16.mxu0 0
    %754 = vmatpush1.bf16.msra.mxu0 %v547
    %755 = vmatprep.subr.bf16.mxu0 0
    %756 = vmatpush1.bf16.msra.mxu0 %v548
    %757 = vmatprep.subr.bf16.mxu0 0
    %758 = vmatpush1.bf16.msra.mxu0 %v549
    %759 = vmatprep.subr.bf16.mxu0 0
    %760 = vmatpush1.bf16.msra.mxu0 %v550
    %761 = vmatprep.subr.bf16.mxu0 0
    %762 = vmatpush1.bf16.msra.mxu0 %v551
    %763 = vmatprep.subr.bf16.mxu0 0
    %764 = vmatpush1.bf16.msra.mxu0 %v552
    %765 = vmatprep.subr.bf16.mxu0 0
    %766 = vmatpush1.bf16.msra.mxu0 %v553
    %767 = vmatprep.subr.bf16.mxu0 0
    %768 = vmatpush1.bf16.msra.mxu0 %v554
    %769 = vmatprep.subr.bf16.mxu0 0
    %770 = vmatpush1.bf16.msra.mxu0 %v555
    %771 = vmatprep.subr.bf16.mxu0 0
    %772 = vmatpush1.bf16.msra.mxu0 %v556
    %773 = vmatprep.subr.bf16.mxu0 0
    %774 = vmatpush1.bf16.msra.mxu0 %v557
    %775 = vmatprep.subr.bf16.mxu0 0
    %776 = vmatpush1.bf16.msra.mxu0 %v558
    %777 = vmatprep.subr.bf16.mxu0 0
    %778 = vmatpush1.bf16.msra.mxu0 %v559
    %779 = vmatprep.mubr.bf16.mxu0 %v239
    %780 = vmatmul.mubr.bf16.gmra.mrb[0].mxu0 %v238
    %v781 = vpop.f32.mrb[0].mxu0
    %v782 = vadd.f32 %v741, %v781
    %v783 = vpop.f32.mrb[0].mxu0
    %v784 = vpop.f32.mrb[0].mxu0
    %v785 = vadd.f32 %v744, %v784
    %v786 = vpop.f32.mrb[0].mxu0
    %787 = vdwg.mxu0
    %v788 = vrot.slane %v782, 4
    %v789 = vadd.f32 %v782, %v788
    %v790 = vrot.slane %v789, 2
    %v791 = vadd.f32 %v789, %v790
    %v792 = vrot.slane %v791, 1
    %v793 = vadd.f32 %v791, %v792
    %v794 = vrcp.pop 8.0
    %v795 = vmul.f32 %v793, %v794
    %v796 = vsub.f32 %v782, %v795
    %v797 = vmul.f32 %v796, %v796
    %v798 = vrot.slane %v797, 4
    %v799 = vadd.f32 %v797, %v798
    %v800 = vrot.slane %v799, 2
    %v801 = vadd.f32 %v799, %v800
    %v802 = vrot.slane %v801, 1
    %v803 = vadd.f32 %v801, %v802
    %v804 = vmul.f32 %v803, %v794
    %v805 = vadd.f32 %v804, 1e-05
    %v806 = vrsqrt.pop %v805
    %v807 = vmul.f32 %v796, %v806
    %v809 = vlaneseq
    %v810 = vshrl.u32 %v809, 7
    %v811 = vsub.s32 0, %v810
    %v812 = vrot.slane %v230, %v811
    %v814 = vmul.f32 %v807, %v812
    %v816 = vlaneseq
    %v817 = vshrl.u32 %v816, 7
    %v818 = vsub.s32 0, %v817
    %v819 = vrot.slane %v231, %v818
    %v821 = vadd.f32 %v814, %v819
    %v822 = vmax.f32 %v821, 0.0
    %v823 = vrot.slane %v785, 4
    %v824 = vadd.f32 %v785, %v823
    %v825 = vrot.slane %v824, 2
    %v826 = vadd.f32 %v824, %v825
    %v827 = vrot.slane %v826, 1
    %v828 = vadd.f32 %v826, %v827
    %v829 = vmul.f32 %v828, %v794
    %v830 = vsub.f32 %v785, %v829
    %v831 = vmul.f32 %v830, %v830
    %v832 = vrot.slane %v831, 4
    %v833 = vadd.f32 %v831, %v832
    %v834 = vrot.slane %v833, 2
    %v835 = vadd.f32 %v833, %v834
    %v836 = vrot.slane %v835, 1
    %v837 = vadd.f32 %v835, %v836
    %v838 = vmul.f32 %v837, %v794
    %v839 = vadd.f32 %v838, 1e-05
    %v840 = vrsqrt.pop %v839
    %v841 = vmul.f32 %v830, %v840
    %v842 = vmul.f32 %v841, %v812
    %v843 = vadd.f32 %v842, %v819
    %v844 = vmax.f32 %v843, 0.0
    %v845 = vld [vmem:[#allocation7] sm:$0xf]
    %v846 = vld [vmem:[#allocation7 + $0x4] sm:$0xf]
    %v847 = vld [vmem:[#allocation7 + $0x8] sm:$0xf]
    %v848 = vld [vmem:[#allocation7 + $0xc] sm:$0xf]
    %v849 = vld [vmem:[#allocation7 + $0x10] sm:$0xf]
    %v850 = vld [vmem:[#allocation7 + $0x14] sm:$0xf]
    %v851 = vld [vmem:[#allocation7 + $0x18] sm:$0xf]
    %v852 = vld [vmem:[#allocation7 + $0x1c] sm:$0xf]
    %v853 = vld [vmem:[#allocation7 + $0x20] sm:$0xf]
    %v854 = vld [vmem:[#allocation7 + $0x24] sm:$0xf]
    %v855 = vld [vmem:[#allocation7 + $0x28] sm:$0xf]
    %v856 = vld [vmem:[#allocation7 + $0x2c] sm:$0xf]
    %v857 = vld [vmem:[#allocation7 + $0x30] sm:$0xf]
    %v858 = vld [vmem:[#allocation7 + $0x34] sm:$0xf]
    %v859 = vld [vmem:[#allocation7 + $0x38] sm:$0xf]
    %v860 = vld [vmem:[#allocation7 + $0x3c] sm:$0xf]
    %v861 = vld [vmem:[%s5] sm:$0x1]
    %v862 = vld [vmem:[%s6] sm:$0x1]
    %v863 = vpack.c.bf16 %v844, %v822
    %v880 = vunpack.c.l.b16 %v845
    %v881 = vunpack.c.l.b16 %v846
    %v882 = vunpack.c.l.b16 %v847
    %v883 = vunpack.c.l.b16 %v848
    %v884 = vunpack.c.l.b16 %v849
    %v885 = vunpack.c.l.b16 %v850
    %v886 = vunpack.c.l.b16 %v851
    %v887 = vunpack.c.l.b16 %v852
    %v888 = vunpack.c.l.b16 %v853
    %v889 = vunpack.c.l.b16 %v854
    %v890 = vunpack.c.l.b16 %v855
    %v891 = vunpack.c.l.b16 %v856
    %v892 = vunpack.c.l.b16 %v857
    %v893 = vunpack.c.l.b16 %v858
    %v894 = vunpack.c.l.b16 %v859
    %v895 = vunpack.c.l.b16 %v860
    %v896 = vpack.c.b16 %v881, %v880
    %v897 = vpack.c.b16 %v883, %v882
    %v898 = vpack.c.b16 %v885, %v884
    %v899 = vpack.c.b16 %v887, %v886
    %v900 = vpack.c.b16 %v889, %v888
    %v901 = vpack.c.b16 %v891, %v890
    %v902 = vpack.c.b16 %v893, %v892
    %v903 = vpack.c.b16 %v895, %v894
    %912 = vmatprep.subr.bf16.mxu0 0
    %913 = vmatpush1.bf16.msra.mxu0 %v896
    %914 = vmatprep.subr.bf16.mxu0 0
    %915 = vmatpush1.bf16.msra.mxu0 %v897
    %916 = vmatprep.subr.bf16.mxu0 0
    %917 = vmatpush1.bf16.msra.mxu0 %v898
    %918 = vmatprep.subr.bf16.mxu0 0
    %919 = vmatpush1.bf16.msra.mxu0 %v899
    %920 = vmatprep.subr.bf16.mxu0 0
    %921 = vmatpush1.bf16.msra.mxu0 %v900
    %922 = vmatprep.subr.bf16.mxu0 0
    %923 = vmatpush1.bf16.msra.mxu0 %v901
    %924 = vmatprep.subr.bf16.mxu0 0
    %925 = vmatpush1.bf16.msra.mxu0 %v902
    %926 = vmatprep.subr.bf16.mxu0 0
    %927 = vmatpush1.bf16.msra.mxu0 %v903
    %928 = vmatprep.subr.bf16.mxu0 0
    %929 = vmatpush1.bf16.msra.mxu0 0
    %930 = vmatprep.subr.bf16.mxu0 0
    %931 = vmatpush1.bf16.msra.mxu0 0
    %932 = vmatprep.subr.bf16.mxu0 0
    %933 = vmatpush1.bf16.msra.mxu0 0
    %934 = vmatprep.subr.bf16.mxu0 0
    %935 = vmatpush1.bf16.msra.mxu0 0
    %936 = vmatprep.subr.bf16.mxu0 0
    %937 = vmatpush1.bf16.msra.mxu0 0
    %938 = vmatprep.subr.bf16.mxu0 0
    %939 = vmatpush1.bf16.msra.mxu0 0
    %940 = vmatprep.subr.bf16.mxu0 0
    %941 = vmatpush1.bf16.msra.mxu0 0
    %942 = vmatprep.subr.bf16.mxu0 0
    %943 = vmatpush1.bf16.msra.mxu0 0
    %944 = vmatprep.mubr.bf16.mxu0 0
    %945 = vmatmul.mubr.bf16.gmra.mrb[0].mxu0 %v863
    %v946 = vpop.f32.mrb[0].mxu0
    %v947 = vadd.f32 0.0, %v946
    %v948 = vpop.f32.mrb[0].mxu0
    %v949 = vpop.f32.mrb[0].mxu0
    %v950 = vadd.f32 0.0, %v949
    %v951 = vpop.f32.mrb[0].mxu0
    %952 = vdwg.mxu0
    %v953 = vrot.slane %v947, 4
    %v954 = vadd.f32 %v947, %v953
    %v955 = vrot.slane %v954, 2
    %v956 = vadd.f32 %v954, %v955
    %v957 = vrot.slane %v956, 1
    %v958 = vadd.f32 %v956, %v957
    %v959 = vmul.f32 %v958, %v794
    %v960 = vsub.f32 %v947, %v959
    %v961 = vmul.f32 %v960, %v960
    %v962 = vrot.slane %v961, 4
    %v963 = vadd.f32 %v961, %v962
    %v964 = vrot.slane %v963, 2
    %v965 = vadd.f32 %v963, %v964
    %v966 = vrot.slane %v965, 1
    %v967 = vadd.f32 %v965, %v966
    %v968 = vmul.f32 %v967, %v794
    %v969 = vadd.f32 %v968, 1e-05
    %v970 = vrsqrt.pop %v969
    %v971 = vmul.f32 %v960, %v970
    %v973 = vlaneseq
    %v974 = vshrl.u32 %v973, 7
    %v975 = vsub.s32 0, %v974
    %v976 = vrot.slane %v861, %v975
    %v978 = vmul.f32 %v971, %v976
    %v980 = vlaneseq
    %v981 = vshrl.u32 %v980, 7
    %v982 = vsub.s32 0, %v981
    %v983 = vrot.slane %v862, %v982
    %v985 = vadd.f32 %v978, %v983
    %v986 = vmax.f32 %v985, 0.0
    %v987 = vrot.slane %v950, 4
    %v988 = vadd.f32 %v950, %v987
    %v989 = vrot.slane %v988, 2
    %v990 = vadd.f32 %v988, %v989
    %v991 = vrot.slane %v990, 1
    %v992 = vadd.f32 %v990, %v991
    %v993 = vmul.f32 %v992, %v794
    %v994 = vsub.f32 %v950, %v993
    %v995 = vmul.f32 %v994, %v994
    %v996 = vrot.slane %v995, 4
    %v997 = vadd.f32 %v995, %v996
    %v998 = vrot.slane %v997, 2
    %v999 = vadd.f32 %v997, %v998
    %v1000 = vrot.slane %v999, 1
    %v1001 = vadd.f32 %v999, %v1000
    %v1002 = vmul.f32 %v1001, %v794
    %v1003 = vadd.f32 %v1002, 1e-05
    %v1004 = vrsqrt.pop %v1003
    %v1005 = vmul.f32 %v994, %v1004
    %v1006 = vmul.f32 %v1005, %v976
    %v1007 = vadd.f32 %v1006, %v983
    %v1008 = vmax.f32 %v1007, 0.0
    %v1009 = vpack.c.bf16 %v1008, %v986
    %v1010 = vld [vmem:[#allocation8] sm:$0xf]
    %v1011 = vld [vmem:[#allocation8 + $0x4] sm:$0xf]
    %v1012 = vld [vmem:[#allocation8 + $0x8] sm:$0xf]
    %v1013 = vld [vmem:[#allocation8 + $0xc] sm:$0xf]
    %v1014 = vld [vmem:[#allocation8 + $0x10] sm:$0xf]
    %v1015 = vld [vmem:[#allocation8 + $0x14] sm:$0xf]
    %v1016 = vld [vmem:[#allocation8 + $0x18] sm:$0xf]
    %v1017 = vld [vmem:[#allocation8 + $0x1c] sm:$0xf]
    %v1018 = vld [vmem:[#allocation8 + $0x20] sm:$0xf]
    %v1019 = vld [vmem:[#allocation8 + $0x24] sm:$0xf]
    %v1020 = vld [vmem:[#allocation8 + $0x28] sm:$0xf]
    %v1021 = vld [vmem:[#allocation8 + $0x2c] sm:$0xf]
    %v1022 = vld [vmem:[#allocation8 + $0x30] sm:$0xf]
    %v1023 = vld [vmem:[#allocation8 + $0x34] sm:$0xf]
    %v1024 = vld [vmem:[#allocation8 + $0x38] sm:$0xf]
    %v1025 = vld [vmem:[#allocation8 + $0x3c] sm:$0xf]
    %v1042 = vunpack.c.l.b16 %v1010
    %v1043 = vunpack.c.l.b16 %v1011
    %v1044 = vunpack.c.l.b16 %v1012
    %v1045 = vunpack.c.l.b16 %v1013
    %v1046 = vunpack.c.l.b16 %v1014
    %v1047 = vunpack.c.l.b16 %v1015
    %v1048 = vunpack.c.l.b16 %v1016
    %v1049 = vunpack.c.l.b16 %v1017
    %v1050 = vunpack.c.l.b16 %v1018
    %v1051 = vunpack.c.l.b16 %v1019
    %v1052 = vunpack.c.l.b16 %v1020
    %v1053 = vunpack.c.l.b16 %v1021
    %v1054 = vunpack.c.l.b16 %v1022
    %v1055 = vunpack.c.l.b16 %v1023
    %v1056 = vunpack.c.l.b16 %v1024
    %v1057 = vunpack.c.l.b16 %v1025
    %v1058 = vpack.c.b16 %v1043, %v1042
    %v1059 = vpack.c.b16 %v1045, %v1044
    %v1060 = vpack.c.b16 %v1047, %v1046
    %v1061 = vpack.c.b16 %v1049, %v1048
    %v1062 = vpack.c.b16 %v1051, %v1050
    %v1063 = vpack.c.b16 %v1053, %v1052
    %v1064 = vpack.c.b16 %v1055, %v1054
    %v1065 = vpack.c.b16 %v1057, %v1056
    %1074 = vmatprep.subr.bf16.mxu0 0
    %1075 = vmatpush1.bf16.msra.mxu0 %v1058
    %1076 = vmatprep.subr.bf16.mxu0 0
    %1077 = vmatpush1.bf16.msra.mxu0 %v1059
    %1078 = vmatprep.subr.bf16.mxu0 0
    %1079 = vmatpush1.bf16.msra.mxu0 %v1060
    %1080 = vmatprep.subr.bf16.mxu0 0
    %1081 = vmatpush1.bf16.msra.mxu0 %v1061
    %1082 = vmatprep.subr.bf16.mxu0 0
    %1083 = vmatpush1.bf16.msra.mxu0 %v1062
    %1084 = vmatprep.subr.bf16.mxu0 0
    %1085 = vmatpush1.bf16.msra.mxu0 %v1063
    %1086 = vmatprep.subr.bf16.mxu0 0
    %1087 = vmatpush1.bf16.msra.mxu0 %v1064
    %1088 = vmatprep.subr.bf16.mxu0 0
    %1089 = vmatpush1.bf16.msra.mxu0 %v1065
    %1090 = vmatprep.subr.bf16.mxu0 0
    %1091 = vmatpush1.bf16.msra.mxu0 0
    %1092 = vmatprep.subr.bf16.mxu0 0
    %1093 = vmatpush1.bf16.msra.mxu0 0
    %1094 = vmatprep.subr.bf16.mxu0 0
    %1095 = vmatpush1.bf16.msra.mxu0 0
    %1096 = vmatprep.subr.bf16.mxu0 0
    %1097 = vmatpush1.bf16.msra.mxu0 0
    %1098 = vmatprep.subr.bf16.mxu0 0
    %1099 = vmatpush1.bf16.msra.mxu0 0
    %1100 = vmatprep.subr.bf16.mxu0 0
    %1101 = vmatpush1.bf16.msra.mxu0 0
    %1102 = vmatprep.subr.bf16.mxu0 0
    %1103 = vmatpush1.bf16.msra.mxu0 0
    %1104 = vmatprep.subr.bf16.mxu0 0
    %1105 = vmatpush1.bf16.msra.mxu0 0
    %1106 = vmatprep.mubr.bf16.mxu0 0
    %1107 = vmatmul.mubr.bf16.gmra.mrb[0].mxu0 %v1009
    %v1108 = vpop.f32.mrb[0].mxu0
    %v1109 = vadd.f32 0.0, %v1108
    %v1110 = vpop.f32.mrb[0].mxu0
    %v1111 = vpop.f32.mrb[0].mxu0
    %v1112 = vadd.f32 0.0, %v1111
    %v1113 = vpop.f32.mrb[0].mxu0
    %1114 = vdwg.mxu0
    %v1115 = vrot.slane %v1109, 4
    %v1116 = vadd.f32 %v1109, %v1115
    %v1117 = vrot.slane %v1116, 2
    %v1118 = vadd.f32 %v1116, %v1117
    %v1119 = vrot.slane %v1118, 1
    %v1120 = vadd.f32 %v1118, %v1119
    %v1121 = vmul.f32 %v1120, %v794
    %v1122 = vsub.f32 %v1109, %v1121
    %v1123 = vmul.f32 %v1122, %v1122
    %v1124 = vrot.slane %v1123, 4
    %v1125 = vadd.f32 %v1123, %v1124
    %v1126 = vrot.slane %v1125, 2
    %v1127 = vadd.f32 %v1125, %v1126
    %v1128 = vrot.slane %v1127, 1
    %v1129 = vadd.f32 %v1127, %v1128
    %v1130 = vmul.f32 %v1129, %v794
    %v1131 = vadd.f32 %v1130, 1e-05
    %v1132 = vrsqrt.pop %v1131
    %v1133 = vmul.f32 %v1122, %v1132
    %v1134 = vrot.slane %v1112, 4
    %v1135 = vadd.f32 %v1112, %v1134
    %v1136 = vrot.slane %v1135, 2
    %v1137 = vadd.f32 %v1135, %v1136
    %v1138 = vrot.slane %v1137, 1
    %v1139 = vadd.f32 %v1137, %v1138
    %v1140 = vmul.f32 %v1139, %v794
    %v1141 = vsub.f32 %v1112, %v1140
    %v1142 = vmul.f32 %v1141, %v1141
    %v1143 = vrot.slane %v1142, 4
    %v1144 = vadd.f32 %v1142, %v1143
    %v1145 = vrot.slane %v1144, 2
    %v1146 = vadd.f32 %v1144, %v1145
    %v1147 = vrot.slane %v1146, 1
    %v1148 = vadd.f32 %v1146, %v1147
    %v1149 = vmul.f32 %v1148, %v794
    %v1150 = vadd.f32 %v1149, 1e-05
    %v1151 = vrsqrt.pop %v1150
    %v1152 = vmul.f32 %v1141, %v1151
    %1153 = vxpose.xlu0.b32.start [1/16] %v1133, 128
    %1154 = vxpose.xlu0.b32.cont [2/16] 0.0, 128
    %1155 = vxpose.xlu0.b32.cont [3/16] 0.0, 128
    %1156 = vxpose.xlu0.b32.cont [4/16] 0.0, 128
    %1157 = vxpose.xlu0.b32.cont [5/16] 0.0, 128
    %1158 = vxpose.xlu0.b32.cont [6/16] 0.0, 128
    %1159 = vxpose.xlu0.b32.cont [7/16] 0.0, 128
    %1160 = vxpose.xlu0.b32.cont [8/16] 0.0, 128
    %1161 = vxpose.xlu0.b32.cont [9/16] 0.0, 128
    %1162 = vxpose.xlu0.b32.cont [10/16] 0.0, 128
    %1163 = vxpose.xlu0.b32.cont [11/16] 0.0, 128
    %1164 = vxpose.xlu0.b32.cont [12/16] 0.0, 128
    %1165 = vxpose.xlu0.b32.cont [13/16] 0.0, 128
    %1166 = vxpose.xlu0.b32.cont [14/16] 0.0, 128
    %1167 = vxpose.xlu0.b32.cont [15/16] 0.0, 128
    %1168 = vxpose.xlu0.b32.end [16/16] 0.0, 128
    %v1169 = vpop.trf.xlu0
    %v1170 = vpop.trf.xlu0
    %v1171 = vpop.trf.xlu0
    %v1172 = vpop.trf.xlu0
    %v1173 = vpop.trf.xlu0
    %v1174 = vpop.trf.xlu0
    %v1175 = vpop.trf.xlu0
    %v1176 = vpop.trf.xlu0
    %v1177 = vpop.trf.xlu0
    %v1178 = vpop.trf.xlu0
    %v1179 = vpop.trf.xlu0
    %v1180 = vpop.trf.xlu0
    %v1181 = vpop.trf.xlu0
    %v1182 = vpop.trf.xlu0
    %v1183 = vpop.trf.xlu0
    %v1184 = vpop.trf.xlu0
    %vm1185 = vcmask 64512
    %v1187 = vsel %vm1185, %v1169, 0
    %v1190 = vsel %vm1185, %v1170, 0
    %v1193 = vsel %vm1185, %v1171, 0
    %v1196 = vsel %vm1185, %v1172, 0
    %v1199 = vsel %vm1185, %v1173, 0
    %v1202 = vsel %vm1185, %v1174, 0
    %v1205 = vsel %vm1185, %v1175, 0
    %v1208 = vsel %vm1185, %v1176, 0
    %v1211 = vsel %vm1185, %v1177, 0
    %v1214 = vsel %vm1185, %v1178, 0
    %v1217 = vsel %vm1185, %v1179, 0
    %v1220 = vsel %vm1185, %v1180, 0
    %v1223 = vsel %vm1185, %v1181, 0
    %v1226 = vsel %vm1185, %v1182, 0
    %v1229 = vsel %vm1185, %v1183, 0
    %v1232 = vsel %vm1185, %v1184, 0
    %1234 = vmatprep.subr.mxu0 0.0
    %1235 = vmatpush1.msra.mxu0 %v1152
    %1236 = vmatprep.subr.mxu0 0.0
    %1237 = vmatpush1.msra.mxu0 0.0
    %1238 = vmatprep.subr.mxu0 0.0
    %1239 = vmatpush1.msra.mxu0 0.0
    %1240 = vmatprep.subr.mxu0 0.0
    %1241 = vmatpush1.msra.mxu0 0.0
    %1242 = vmatprep.subr.mxu0 0.0
    %1243 = vmatpush1.msra.mxu0 0.0
    %1244 = vmatprep.subr.mxu0 0.0
    %1245 = vmatpush1.msra.mxu0 0.0
    %1246 = vmatprep.subr.mxu0 0.0
    %1247 = vmatpush1.msra.mxu0 0.0
    %1248 = vmatprep.subr.mxu0 0.0
    %1249 = vmatpush1.msra.mxu0 0.0
    %1250 = vmatprep.subr.mxu0 0.0
    %1251 = vmatpush1.msra.mxu0 0.0
    %1252 = vmatprep.subr.mxu0 0.0
    %1253 = vmatpush1.msra.mxu0 0.0
    %1254 = vmatprep.subr.mxu0 0.0
    %1255 = vmatpush1.msra.mxu0 0.0
    %1256 = vmatprep.subr.mxu0 0.0
    %1257 = vmatpush1.msra.mxu0 0.0
    %1258 = vmatprep.subr.mxu0 0.0
    %1259 = vmatpush1.msra.mxu0 0.0
    %1260 = vmatprep.subr.mxu0 0.0
    %1261 = vmatpush1.msra.mxu0 0.0
    %1262 = vmatprep.subr.mxu0 0.0
    %1263 = vmatpush1.msra.mxu0 0.0
    %1264 = vmatprep.subr.mxu0 0.0
    %1265 = vmatpush1.msra.mxu0 0.0
    %1266 = vmatprep.subr.mxu0 0.0
    %1267 = vmatpush1.msra.mxu0 0.0
    %1268 = vmatprep.subr.mxu0 0.0
    %1269 = vmatpush1.msra.mxu0 0.0
    %1270 = vmatprep.subr.mxu0 0.0
    %1271 = vmatpush1.msra.mxu0 0.0
    %1272 = vmatprep.subr.mxu0 0.0
    %1273 = vmatpush1.msra.mxu0 0.0
    %1274 = vmatprep.subr.mxu0 0.0
    %1275 = vmatpush1.msra.mxu0 0.0
    %1276 = vmatprep.subr.mxu0 0.0
    %1277 = vmatpush1.msra.mxu0 0.0
    %1278 = vmatprep.subr.mxu0 0.0
    %1279 = vmatpush1.msra.mxu0 0.0
    %1280 = vmatprep.subr.mxu0 0.0
    %1281 = vmatpush1.msra.mxu0 0.0
    %1282 = vmatprep.subr.mxu0 0.0
    %1283 = vmatpush1.msra.mxu0 0.0
    %1284 = vmatprep.subr.mxu0 0.0
    %1285 = vmatpush1.msra.mxu0 0.0
    %1286 = vmatprep.subr.mxu0 0.0
    %1287 = vmatpush1.msra.mxu0 0.0
    %1288 = vmatprep.subr.mxu0 0.0
    %1289 = vmatpush1.msra.mxu0 0.0
    %1290 = vmatprep.subr.mxu0 0.0
    %1291 = vmatpush1.msra.mxu0 0.0
    %1292 = vmatprep.subr.mxu0 0.0
    %1293 = vmatpush1.msra.mxu0 0.0
    %1294 = vmatprep.subr.mxu0 0.0
    %1295 = vmatpush1.msra.mxu0 0.0
    %1296 = vmatprep.subr.mxu0 0.0
    %1297 = vmatpush1.msra.mxu0 0.0
    %1298 = vmatprep.mubr.f32.mxu0 0.0
    %1299 = vmatmul.mubr.f32.gmra.mrb[0].mxu0 %v1187
    %v1300 = vpop.f32.mrb[0].mxu0
    %v1301 = vadd.f32 0.0, %v1300
    %v1302 = vpop.f32.mrb[0].mxu0
    %1303 = vmatprep.mubr.f32.mxu0 0.0
    %1304 = vmatmul.mubr.f32.gmra.mrb[0].mxu0 %v1190
    %v1305 = vpop.f32.mrb[0].mxu0
    %v1306 = vadd.f32 0.0, %v1305
    %v1307 = vpop.f32.mrb[0].mxu0
    %1308 = vmatprep.mubr.f32.mxu0 0.0
    %1309 = vmatmul.mubr.f32.gmra.mrb[0].mxu0 %v1193
    %v1310 = vpop.f32.mrb[0].mxu0
    %v1311 = vadd.f32 0.0, %v1310
    %v1312 = vpop.f32.mrb[0].mxu0
    %1313 = vmatprep.mubr.f32.mxu0 0.0
    %1314 = vmatmul.mubr.f32.gmra.mrb[0].mxu0 %v1196
    %v1315 = vpop.f32.mrb[0].mxu0
    %v1316 = vadd.f32 0.0, %v1315
    %v1317 = vpop.f32.mrb[0].mxu0
    %1318 = vmatprep.mubr.f32.mxu0 0.0
    %1319 = vmatmul.mubr.f32.gmra.mrb[0].mxu0 %v1199
    %v1320 = vpop.f32.mrb[0].mxu0
    %v1321 = vadd.f32 0.0, %v1320
    %v1322 = vpop.f32.mrb[0].mxu0
    %1323 = vmatprep.mubr.f32.mxu0 0.0
    %1324 = vmatmul.mubr.f32.gmra.mrb[0].mxu0 %v1202
    %v1325 = vpop.f32.mrb[0].mxu0
    %v1326 = vadd.f32 0.0, %v1325
    %v1327 = vpop.f32.mrb[0].mxu0
    %1328 = vmatprep.mubr.f32.mxu0 0.0
    %1329 = vmatmul.mubr.f32.gmra.mrb[0].mxu0 %v1205
    %v1330 = vpop.f32.mrb[0].mxu0
    %v1331 = vadd.f32 0.0, %v1330
    %v1332 = vpop.f32.mrb[0].mxu0
    %1333 = vmatprep.mubr.f32.mxu0 0.0
    %1334 = vmatmul.mubr.f32.gmra.mrb[0].mxu0 %v1208
    %v1335 = vpop.f32.mrb[0].mxu0
    %v1336 = vadd.f32 0.0, %v1335
    %v1337 = vpop.f32.mrb[0].mxu0
    %1338 = vmatprep.mubr.f32.mxu0 0.0
    %1339 = vmatmul.mubr.f32.gmra.mrb[0].mxu0 %v1211
    %v1340 = vpop.f32.mrb[0].mxu0
    %v1341 = vadd.f32 0.0, %v1340
    %v1342 = vpop.f32.mrb[0].mxu0
    %1343 = vmatprep.mubr.f32.mxu0 0.0
    %1344 = vmatmul.mubr.f32.gmra.mrb[0].mxu0 %v1214
    %v1345 = vpop.f32.mrb[0].mxu0
    %v1346 = vadd.f32 0.0, %v1345
    %v1347 = vpop.f32.mrb[0].mxu0
    %1348 = vmatprep.mubr.f32.mxu0 0.0
    %1349 = vmatmul.mubr.f32.gmra.mrb[0].mxu0 %v1217
    %v1350 = vpop.f32.mrb[0].mxu0
    %v1351 = vadd.f32 0.0, %v1350
    %v1352 = vpop.f32.mrb[0].mxu0
    %1353 = vmatprep.mubr.f32.mxu0 0.0
    %1354 = vmatmul.mubr.f32.gmra.mrb[0].mxu0 %v1220
    %v1355 = vpop.f32.mrb[0].mxu0
    %v1356 = vadd.f32 0.0, %v1355
    %v1357 = vpop.f32.mrb[0].mxu0
    %1358 = vmatprep.mubr.f32.mxu0 0.0
    %1359 = vmatmul.mubr.f32.gmra.mrb[0].mxu0 %v1223
    %v1360 = vpop.f32.mrb[0].mxu0
    %v1361 = vadd.f32 0.0, %v1360
    %v1362 = vpop.f32.mrb[0].mxu0
    %1363 = vmatprep.mubr.f32.mxu0 0.0
    %1364 = vmatmul.mubr.f32.gmra.mrb[0].mxu0 %v1226
    %v1365 = vpop.f32.mrb[0].mxu0
    %v1366 = vadd.f32 0.0, %v1365
    %v1367 = vpop.f32.mrb[0].mxu0
    %1368 = vmatprep.mubr.f32.mxu0 0.0
    %1369 = vmatmul.mubr.f32.gmra.mrb[0].mxu0 %v1229
    %v1370 = vpop.f32.mrb[0].mxu0
    %v1371 = vadd.f32 0.0, %v1370
    %v1372 = vpop.f32.mrb[0].mxu0
    %1373 = vmatprep.mubr.f32.mxu0 0.0
    %1374 = vmatmul.mubr.f32.gmra.mrb[0].mxu0 %v1232
    %v1375 = vpop.f32.mrb[0].mxu0
    %v1376 = vadd.f32 0.0, %v1375
    %v1377 = vpop.f32.mrb[0].mxu0
    %1378 = vdwg.mxu0
    %v1379 = vmul.f32 %v1301, 0.125
    %v1380 = vmul.f32 %v1306, 0.125
    %v1381 = vmul.f32 %v1311, 0.125
    %v1382 = vmul.f32 %v1316, 0.125
    %v1383 = vmul.f32 %v1321, 0.125
    %v1384 = vmul.f32 %v1326, 0.125
    %v1385 = vmul.f32 %v1331, 0.125
    %v1386 = vmul.f32 %v1336, 0.125
    %v1387 = vmul.f32 %v1341, 0.125
    %v1388 = vmul.f32 %v1346, 0.125
    %v1389 = vmul.f32 %v1351, 0.125
    %v1390 = vmul.f32 %v1356, 0.125
    %v1391 = vmul.f32 %v1361, 0.125
    %v1392 = vmul.f32 %v1366, 0.125
    %v1393 = vmul.f32 %v1371, 0.125
    %v1394 = vmul.f32 %v1376, 0.125
    %v1395 = vlaneseq
    %v1396 = vshrl.u32 %v1395, 7
    %v1397 = vadd.s32 %v1396, 8
    %v1398 = vadd.s32 %v1396, 16
    %v1399 = vadd.s32 %v1396, 24
    %v1400 = vadd.s32 %v1396, 32
    %v1401 = vadd.s32 %v1396, 40
    %v1402 = vadd.s32 %v1396, 48
    %v1403 = vadd.s32 %v1396, 56
    %v1404 = vadd.s32 %v1396, 64
    %v1405 = vadd.s32 %v1396, 72
    %v1406 = vadd.s32 %v1396, 80
    %v1407 = vadd.s32 %v1396, 88
    %v1408 = vadd.s32 %v1396, 96
    %v1409 = vadd.s32 %v1396, 104
    %v1410 = vadd.s32 %v1396, 112
    %v1411 = vadd.s32 %v1396, 120
    %v1412 = vlaneseq
    %v1413 = vand.u32 %v1412, 127
    %vm1414 = vcmp.eq.s32.totalorder %v1396, %v1413
    %vm1415 = vcmp.eq.s32.totalorder %v1397, %v1413
    %vm1416 = vcmp.eq.s32.totalorder %v1398, %v1413
    %vm1417 = vcmp.eq.s32.totalorder %v1399, %v1413
    %vm1418 = vcmp.eq.s32.totalorder %v1400, %v1413
    %vm1419 = vcmp.eq.s32.totalorder %v1401, %v1413
    %vm1420 = vcmp.eq.s32.totalorder %v1402, %v1413
    %vm1421 = vcmp.eq.s32.totalorder %v1403, %v1413
    %vm1422 = vcmp.eq.s32.totalorder %v1404, %v1413
    %vm1423 = vcmp.eq.s32.totalorder %v1405, %v1413
    %vm1424 = vcmp.eq.s32.totalorder %v1406, %v1413
    %vm1425 = vcmp.eq.s32.totalorder %v1407, %v1413
    %vm1426 = vcmp.eq.s32.totalorder %v1408, %v1413
    %vm1427 = vcmp.eq.s32.totalorder %v1409, %v1413
    %vm1428 = vcmp.eq.s32.totalorder %v1410, %v1413
    %vm1429 = vcmp.eq.s32.totalorder %v1411, %v1413
    %v1430 = vmul.f32 %v1379, %v1379
    %v1431 = vmul.f32 %v1380, %v1380
    %v1432 = vmul.f32 %v1381, %v1381
    %v1433 = vmul.f32 %v1382, %v1382
    %v1434 = vmul.f32 %v1383, %v1383
    %v1435 = vmul.f32 %v1384, %v1384
    %v1436 = vmul.f32 %v1385, %v1385
    %v1437 = vmul.f32 %v1386, %v1386
    %v1438 = vmul.f32 %v1387, %v1387
    %v1439 = vmul.f32 %v1388, %v1388
    %v1440 = vmul.f32 %v1389, %v1389
    %v1441 = vmul.f32 %v1390, %v1390
    %v1442 = vmul.f32 %v1391, %v1391
    %v1443 = vmul.f32 %v1392, %v1392
    %v1444 = vmul.f32 %v1393, %v1393
    %v1445 = vmul.f32 %v1394, %v1394
    %v1446 = vadd.f32 %v1430, %v1431
    %v1447 = vadd.f32 %v1446, %v1432
    %v1448 = vadd.f32 %v1447, %v1433
    %v1449 = vadd.f32 %v1448, %v1434
    %v1450 = vadd.f32 %v1449, %v1435
    %v1451 = vadd.f32 %v1450, %v1436
    %v1452 = vadd.f32 %v1451, %v1437
    %v1453 = vadd.f32 %v1452, %v1438
    %v1454 = vadd.f32 %v1453, %v1439
    %v1455 = vadd.f32 %v1454, %v1440
    %v1456 = vadd.f32 %v1455, %v1441
    %v1457 = vadd.f32 %v1456, %v1442
    %v1458 = vadd.f32 %v1457, %v1443
    %v1459 = vadd.f32 %v1458, %v1444
    %v1460 = vadd.f32 %v1459, %v1445
    %1461 = vadd.xlane.f32.xlu0 %v1460
    %v1462 = vpop.xlane.xlu0 %1461
    %v1463 = vrot.slane %v1462, 4
    %v1464 = vadd.f32 %v1462, %v1463
    %v1465 = vrot.slane %v1464, 2
    %v1466 = vadd.f32 %v1464, %v1465
    %v1467 = vrot.slane %v1466, 1
    %v1468 = vadd.f32 %v1466, %v1467
    %s1469 = vtos %v1468
    %v1470 = vstv %s1469
    %v1471 = vsel %vm1414, %v1430, 0.0
    %v1472 = vsel %vm1415, %v1431, 0.0
    %v1473 = vsel %vm1416, %v1432, 0.0
    %v1474 = vsel %vm1417, %v1433, 0.0
    %v1475 = vsel %vm1418, %v1434, 0.0
    %v1476 = vsel %vm1419, %v1435, 0.0
    %v1477 = vsel %vm1420, %v1436, 0.0
    %v1478 = vsel %vm1421, %v1437, 0.0
    %v1479 = vsel %vm1422, %v1438, 0.0
    %v1480 = vsel %vm1423, %v1439, 0.0
    %v1481 = vsel %vm1424, %v1440, 0.0
    %v1482 = vsel %vm1425, %v1441, 0.0
    %v1483 = vsel %vm1426, %v1442, 0.0
    %v1484 = vsel %vm1427, %v1443, 0.0
    %v1485 = vsel %vm1428, %v1444, 0.0
    %v1486 = vsel %vm1429, %v1445, 0.0
    %v1487 = vadd.f32 %v1471, %v1472
    %v1488 = vadd.f32 %v1487, %v1473
    %v1489 = vadd.f32 %v1488, %v1474
    %v1490 = vadd.f32 %v1489, %v1475
    %v1491 = vadd.f32 %v1490, %v1476
    %v1492 = vadd.f32 %v1491, %v1477
    %v1493 = vadd.f32 %v1492, %v1478
    %v1494 = vadd.f32 %v1493, %v1479
    %v1495 = vadd.f32 %v1494, %v1480
    %v1496 = vadd.f32 %v1495, %v1481
    %v1497 = vadd.f32 %v1496, %v1482
    %v1498 = vadd.f32 %v1497, %v1483
    %v1499 = vadd.f32 %v1498, %v1484
    %v1500 = vadd.f32 %v1499, %v1485
    %v1501 = vadd.f32 %v1500, %v1486
    %1502 = vadd.xlane.f32.xlu0 %v1501
    %v1503 = vpop.xlane.xlu0 %1502
    %v1504 = vrot.slane %v1503, 4
    %v1505 = vadd.f32 %v1503, %v1504
    %v1506 = vrot.slane %v1505, 2
    %v1507 = vadd.f32 %v1505, %v1506
    %v1508 = vrot.slane %v1507, 1
    %v1509 = vadd.f32 %v1507, %v1508
    %s1510 = vtos %v1509
    %v1511 = vstv %s1510
    %v1512 = vsel %vm1414, %v1379, 0.0
    %v1513 = vsel %vm1415, %v1380, 0.0
    %v1514 = vsel %vm1416, %v1381, 0.0
    %v1515 = vsel %vm1417, %v1382, 0.0
    %v1516 = vsel %vm1418, %v1383, 0.0
    %v1517 = vsel %vm1419, %v1384, 0.0
    %v1518 = vsel %vm1420, %v1385, 0.0
    %v1519 = vsel %vm1421, %v1386, 0.0
    %v1520 = vsel %vm1422, %v1387, 0.0
    %v1521 = vsel %vm1423, %v1388, 0.0
    %v1522 = vsel %vm1424, %v1389, 0.0
    %v1523 = vsel %vm1425, %v1390, 0.0
    %v1524 = vsel %vm1426, %v1391, 0.0
    %v1525 = vsel %vm1427, %v1392, 0.0
    %v1526 = vsel %vm1428, %v1393, 0.0
    %v1527 = vsel %vm1429, %v1394, 0.0
    %v1528 = vadd.f32 %v1512, %v1513
    %v1529 = vadd.f32 %v1528, %v1514
    %v1530 = vadd.f32 %v1529, %v1515
    %v1531 = vadd.f32 %v1530, %v1516
    %v1532 = vadd.f32 %v1531, %v1517
    %v1533 = vadd.f32 %v1532, %v1518
    %v1534 = vadd.f32 %v1533, %v1519
    %v1535 = vadd.f32 %v1534, %v1520
    %v1536 = vadd.f32 %v1535, %v1521
    %v1537 = vadd.f32 %v1536, %v1522
    %v1538 = vadd.f32 %v1537, %v1523
    %v1539 = vadd.f32 %v1538, %v1524
    %v1540 = vadd.f32 %v1539, %v1525
    %v1541 = vadd.f32 %v1540, %v1526
    %v1542 = vadd.f32 %v1541, %v1527
    %1543 = vadd.xlane.f32.xlu0 %v1542
    %v1544 = vpop.xlane.xlu0 %1543
    %v1545 = vrot.slane %v1544, 4
    %v1546 = vadd.f32 %v1544, %v1545
    %v1547 = vrot.slane %v1546, 2
    %v1548 = vadd.f32 %v1546, %v1547
    %v1549 = vrot.slane %v1548, 1
    %v1550 = vadd.f32 %v1548, %v1549
    %s1551 = vtos %v1550
    %v1552 = vstv %s1551
    %v1553 = vmul.f32 %v1552, 2.0
    %v1554 = vsub.f32 %v1511, %v1553
    %v1555 = vadd.f32 %v1554, 128.0
    %v1556 = vsub.f32 %v1470, %v1511
    %v1557 = vmul.f32 %v1556, 0.0051
    %v1558 = vadd.f32 %v1555, %v1557
    %1559 = vst [vmem:[#allocation10] sm:$0x1] %v1558
    // Predicated region
    $region50: #{tpu_custom_call.1} parent=1 // pred_check
      _
    $region51: #{tpu_custom_call.1} parent=1 // pred_check_branch
      %1561 = sbr.rel (0) target = $region53
    $region52: #{tpu_custom_call.1} parent=1 // pred_region
      %s1563 = ssub.s32 16, 16
      %1564 = vsyncadd [#allocation4], %s1563
      %s1566 = sshll.u32 [#allocation10], 4
      %s1567 = int_to_ptr.vmem [resolvable:$true] %s1566
      %1569 = dma.vmem_to_hbm [thread:$0]  %s1567, 16, %s8, [#allocation4]
    $region53: #{tpu_custom_call.1} parent=1 // pred_fallthru
      _
    // Predicated region
    $region54: #{tpu_custom_call.1} parent=1 // pred_check
      _
    $region55: #{tpu_custom_call.1} parent=1 // pred_check_branch
      %1571 = sbr.rel (0) target = $region57
    $region56: #{tpu_custom_call.1} parent=1 // pred_region
      %1572 = dma.done [#allocation4], 16
    $region57: #{tpu_custom_call.1} parent=1 // pred_fallthru
      _
    %1573 = vsyncpa [#allocation3], 1
    %1574 = vsyncpa [#allocation6], 1
    %1575 = vsyncpa [#allocation9], 1
    %1576 = vsyncpa [#allocation4], 1

</llo_original>
